<compile_context>
chip_gen: v5e
topology: v5e:2x2
jax: 0.10.0
libtpu: 0.0.40
codegen_flags: <defaults>
</compile_context>

<pallas_src>
import functools
import math

import jax
import jax.numpy as jnp
import numpy as np
from jax.experimental import pallas as pl
from jax.experimental.pallas import tpu as pltpu


def _layer_norm(x, gamma, beta, eps=1e-5):
    mu = jnp.mean(x, axis=-1, keepdims=True)
    var = jnp.mean((x - mu) ** 2, axis=-1, keepdims=True)
    return (x - mu) * jax.lax.rsqrt(var + eps) * gamma + beta


def decoder_layer_zero_kernel(n_heads, dp, pf_chunk, inv_scale,
                              src_ref, trg_ref,
                              wq_ref, bq_ref, wkv_ref, bkv_ref,
                              wo_ref, bo_ref, w1_ref, b1_ref, w2_ref, b2_ref,
                              gamma_ref, beta_ref,
                              out_ref, attn_ref,
                              kv_scratch, ctx_scratch):
    q_idx = pl.program_id(1)
    Bt, S_src, H = src_ref.shape
    _, Tq, _ = trg_ref.shape
    Hp = n_heads * dp
    Mq = Bt * Tq
    Mk = Bt * S_src

    # K/V are query-tile independent: compute them once per batch block
    # (first query tile) into a persistent bf16 VMEM scratch.
    @pl.when(q_idx == 0)
    def _():
        src_bf = src_ref[...].astype(jnp.bfloat16).reshape(Mk, H)
        kv = jnp.dot(src_bf, wkv_ref[...], preferred_element_type=jnp.float32)
        kv = kv + bkv_ref[...]
        kv_scratch[...] = kv.reshape(Bt, S_src, 2 * Hp).astype(jnp.bfloat16)

    trg_f32 = trg_ref[...].astype(jnp.float32)
    trg_bf = trg_f32.reshape(Mq, H).astype(jnp.bfloat16)

    # Q projection; the 1/sqrt(head_dim) scale is applied in f32 (one cheap
    # VPU pass) so the bf16 weights stay identical to the reference weights.
    q = jnp.dot(trg_bf, wq_ref[...], preferred_element_type=jnp.float32)
    q = (q + bq_ref[...]) * inv_scale
    q3 = q.reshape(Bt, Tq, Hp).astype(jnp.bfloat16)

    gamma = gamma_ref[...]
    beta = beta_ref[...]

    # Multi-head attention.  Head slabs are padded to dp lanes (multiple of
    # 128) by the wrapper, so every slice below is lane-aligned.  Attention
    # probabilities are streamed out per head (store overlaps remaining
    # heads / FFN); per-head contexts go into a bf16 scratch so the head
    # merge + output projection is a single K=Hp matmul afterwards.
    for h in range(n_heads):
        qh = q3[:, :, h * dp:(h + 1) * dp]                        # [Bt,Tq,dp]
        kh = kv_scratch[:, :, h * dp:(h + 1) * dp]                # [Bt,Ss,dp]
        vh = kv_scratch[:, :, Hp + h * dp:Hp + (h + 1) * dp]      # [Bt,Ss,dp]
        energy = jnp.einsum('bqd,bkd->bqk', qh, kh,
                            preferred_element_type=jnp.float32)
        m = jnp.max(energy, axis=-1, keepdims=True)
        e = jnp.exp(energy - m)
        attn = e / jnp.sum(e, axis=-1, keepdims=True)   # exact softmax
        attn_ref[:, h:h + 1, :, :] = attn[:, None, :, :].astype(attn_ref.dtype)
        # dropout(attention) is identity in eval mode.
        ctx = jnp.einsum('bqk,bkd->bqd', attn.astype(jnp.bfloat16), vh,
                         preferred_element_type=jnp.float32)
        ctx_scratch[:, :, h * dp:(h + 1) * dp] = ctx.astype(jnp.bfloat16)

    # Merged head concat + output projection: [Mq,Hp] x [Hp,H], K = Hp.
    x_attn = jnp.dot(ctx_scratch[...].reshape(Mq, Hp), wo_ref[...],
                     preferred_element_type=jnp.float32) + bo_ref[...]

    # Residual + LayerNorm (dropout identity in eval mode).
    t1 = _layer_norm(trg_f32.reshape(Mq, H) + x_attn, gamma, beta)
    t1_bf = t1.astype(jnp.bfloat16)

    # Position-wise FFN, chunked over pf_dim so the relu intermediate never
    # materializes at full [Mq, pf_dim] f32 width.
    P = w1_ref.shape[1]
    ffn = jnp.zeros((Mq, H), jnp.float32)
    for c0 in range(0, P, pf_chunk):
        c1 = min(c0 + pf_chunk, P)
        h1 = jnp.dot(t1_bf, w1_ref[:, c0:c1],
                     preferred_element_type=jnp.float32) + b1_ref[:, c0:c1]
        h1 = jnp.maximum(h1, 0.0).astype(jnp.bfloat16)
        ffn = ffn + jnp.dot(h1, w2_ref[c0:c1, :],
                            preferred_element_type=jnp.float32)
    ffn = ffn + b2_ref[...]

    # Second residual + the SAME LayerNorm parameters (shared in the module).
    t2 = _layer_norm(t1 + ffn, gamma, beta)
    out_ref[...] = t2.reshape(Bt, Tq, H).astype(out_ref.dtype)


def _pad_head_cols(w, n_heads, d, dp):
    # [in, n_heads*d] -> [in, n_heads*dp]: zero-pad each head's column slab.
    if dp == d:
        return w
    n_in = w.shape[0]
    w = w.reshape(n_in, n_heads, d)
    w = jnp.pad(w, ((0, 0), (0, 0), (0, dp - d)))
    return w.reshape(n_in, n_heads * dp)


def _pad_head_rows(w, n_heads, d, dp):
    # [n_heads*d, out] -> [n_heads*dp, out]: zero-pad each head's row slab.
    if dp == d:
        return w
    n_out = w.shape[1]
    w = w.reshape(n_heads, d, n_out)
    w = jnp.pad(w, ((0, 0), (0, dp - d), (0, 0)))
    return w.reshape(n_heads * dp, n_out)


def decoder_layer_zero(source, target, params, n_heads, *,
                       block_b=None, block_q=None, attn_dtype=jnp.float32):
    """source: [B, S_src, H], target: [B, S_trg, H]
       -> (out [B, S_trg, H], attn [B, n_heads, S_trg, S_src]).

    attn_dtype: pass jnp.bfloat16 at production sizes (v5e/v7x) to halve the
    attention writeback + VMEM; default f32 keeps exact parity with PyTorch."""
    B, S_src, H = source.shape
    _, S_trg, _ = target.shape
    d = H // n_heads
    pf_dim = params["w1"].shape[0]

    # Pad head slabs to a lane-aligned width so in-kernel per-head slices
    # never cross a 128-lane boundary (zero columns/rows are mathematically
    # inert in every matmul they touch).
    dp = d if d % 128 == 0 else ((d + 127) // 128) * 128
    Hp = n_heads * dp

    # Batch tiling: keep >= 2 grid steps on the batch axis when B >= 2 so
    # both v7x TensorCores get work and input/output DMA is pipelined.
    if block_b is None:
        cap = max(1, min(8, B // 2)) if B > 1 else 1
        block_b = max(c for c in range(1, cap + 1) if B % c == 0)
    assert B % block_b == 0, "batch must be divisible by block_b"
    num_b = B // block_b

    # Query tiling (second grid axis): pipelining + bounded per-step VMEM.
    if block_q is None:
        if S_trg <= 128:
            block_q = S_trg
        else:
            cands = [q for q in range(128, 7, -8) if S_trg % q == 0]
            block_q = cands[0] if cands else S_trg
    assert S_trg % block_q == 0
    assert block_q == S_trg or block_q % 8 == 0
    num_q = S_trg // block_q

    pf_chunk = min(pf_dim, 512)
    inv_scale = 1.0 / math.sqrt(d)

    # ---- Layout plumbing (wrapper side, outside the kernel) ----
    # PyTorch [out, in] -> [in, out]; fuse K/V; pad head slabs; bf16 weights.
    wq_p = _pad_head_cols(params["wq"].T, n_heads, d, dp).astype(jnp.bfloat16)
    bq_p = _pad_head_cols(params["bq"], n_heads, d, dp).astype(jnp.float32)
    wk_p = _pad_head_cols(params["wk"].T, n_heads, d, dp)
    wv_p = _pad_head_cols(params["wv"].T, n_heads, d, dp)
    wkv_p = jnp.concatenate([wk_p, wv_p], axis=1).astype(jnp.bfloat16)
    bkv_p = jnp.concatenate(
        [_pad_head_cols(params["bk"], n_heads, d, dp),
         _pad_head_cols(params["bv"], n_heads, d, dp)],
        axis=1).astype(jnp.float32)
    wo_p = _pad_head_rows(params["wo"].T, n_heads, d, dp).astype(jnp.bfloat16)
    bo = params["bo"].astype(jnp.float32)
    w1_t = params["w1"].T.astype(jnp.bfloat16)
    b1 = params["b1"].astype(jnp.float32)
    w2_t = params["w2"].T.astype(jnp.bfloat16)
    b2 = params["b2"].astype(jnp.float32)
    gamma = params["gamma"].astype(jnp.float32)
    beta = params["beta"].astype(jnp.float32)

    weight_args = (wq_p, bq_p, wkv_p, bkv_p, wo_p, bo,
                   w1_t, b1, w2_t, b2, gamma, beta)

    kernel = functools.partial(decoder_layer_zero_kernel,
                               n_heads, dp, pf_chunk, inv_scale)

    def _const_spec(shape):
        zeros = (0,) * len(shape)
        return pl.BlockSpec(shape, lambda b, q, _z=zeros: _z)

    in_specs = [
        pl.BlockSpec((block_b, S_src, H), lambda b, q: (b, 0, 0)),    # source
        pl.BlockSpec((block_b, block_q, H), lambda b, q: (b, q, 0)),  # target
    ] + [_const_spec(tuple(w.shape)) for w in weight_args]

    out_specs = (
        pl.BlockSpec((block_b, block_q, H), lambda b, q: (b, q, 0)),
        pl.BlockSpec((block_b, n_heads, block_q, S_src),
                     lambda b, q: (b, 0, q, 0)),
    )

    out_shape = (
        jax.ShapeDtypeStruct((B, S_trg, H), target.dtype),
        jax.ShapeDtypeStruct((B, n_heads, S_trg, S_src), attn_dtype),
    )

    scratch_shapes = [
        pltpu.VMEM((block_b, S_src, 2 * Hp), jnp.bfloat16),   # K|V, padded heads
        pltpu.VMEM((block_b, block_q, Hp), jnp.bfloat16),     # per-head contexts
    ]

    # ---- VMEM budget (double-buffered blocks + weights + scratch + temps),
    # clamped to <= 48 MiB so there is headroom on v7x's 64 MiB VMEM. ----
    attn_isz = jnp.dtype(attn_dtype).itemsize
    Mq = block_b * block_q
    block_bytes = 2 * (block_b * S_src * H * source.dtype.itemsize
                       + 2 * block_b * block_q * H * target.dtype.itemsize
                       + block_b * n_heads * block_q * S_src * attn_isz)
    weight_bytes = sum(int(w.size) * w.dtype.itemsize for w in weight_args)
    scratch_bytes = (block_b * S_src * 2 * Hp + block_b * block_q * Hp) * 2
    temp_bytes = 4 * (Mq * Hp + 6 * Mq * H
                      + 4 * block_b * block_q * S_src + Mq * pf_chunk)
    est = block_bytes + 2 * weight_bytes + scratch_bytes + temp_bytes
    vmem_limit = int(min(48 * 1024 * 1024, max(32 * 1024 * 1024, 2 * est)))

    flops = 2 * B * (
        S_trg * H * Hp                        # Q projection
        + S_src * H * 2 * Hp                  # fused K/V projection
        + n_heads * S_trg * S_src * dp * 2    # energy + context
        + S_trg * Hp * H                      # merged output projection
        + S_trg * H * pf_dim * 2)             # FFN
    transcendentals = B * n_heads * S_trg * S_src
    bytes_accessed = (int(source.size) * source.dtype.itemsize
                      + int(target.size) * target.dtype.itemsize
                      + weight_bytes
                      + B * S_trg * H * target.dtype.itemsize
                      + B * n_heads * S_trg * S_src * attn_isz)

    return pl.pallas_call(
        kernel,
        out_shape=out_shape,
        grid_spec=pltpu.PrefetchScalarGridSpec(
            num_scalar_prefetch=0,
            grid=(num_b, num_q),
            in_specs=in_specs,
            out_specs=out_specs,
            scratch_shapes=scratch_shapes),
        compiler_params=pltpu.CompilerParams(
            dimension_semantics=("parallel", "arbitrary"),
            vmem_limit_bytes=vmem_limit),
        cost_estimate=pl.CostEstimate(
            flops=int(flops),
            transcendentals=int(transcendentals),
            bytes_accessed=int(bytes_accessed)),
    )(source, target, *weight_args)


def init_params(key, hid_dim, pf_dim):
    ks = jax.random.split(key, 6)
    s = 0.02
    # Linear weights in PyTorch [out, in] layout; biases stored as (1, out).
    return {
        "wq": s * jax.random.normal(ks[0], (hid_dim, hid_dim), jnp.float32),
        "bq": jnp.zeros((1, hid_dim), jnp.float32),
        "wk": s * jax.random.normal(ks[1], (hid_dim, hid_dim), jnp.float32),
        "bk": jnp.zeros((1, hid_dim), jnp.float32),
        "wv": s * jax.random.normal(ks[2], (hid_dim, hid_dim), jnp.float32),
        "bv": jnp.zeros((1, hid_dim), jnp.float32),
        "wo": s * jax.random.normal(ks[3], (hid_dim, hid_dim), jnp.float32),
        "bo": jnp.zeros((1, hid_dim), jnp.float32),
        "w1": s * jax.random.normal(ks[4], (pf_dim, hid_dim), jnp.float32),
        "b1": jnp.zeros((1, pf_dim), jnp.float32),
        "w2": s * jax.random.normal(ks[5], (hid_dim, pf_dim), jnp.float32),
        "b2": jnp.zeros((1, hid_dim), jnp.float32),
        "gamma": jnp.ones((1, hid_dim), jnp.float32),   # LayerNorm weight
        "beta": jnp.zeros((1, hid_dim), jnp.float32),   # LayerNorm bias
    }


def _reference(source, target, params, n_heads):
    """Pure-JAX f32 reference of DecoderLayerZero (eval mode)."""
    B, S_src, H = source.shape
    _, S_trg, _ = target.shape
    d = H // n_heads

    def lin(x, w, b):
        return x @ w.T + b[0]

    q = lin(target, params["wq"], params["bq"]).reshape(B, S_trg, n_heads, d)
    k = lin(source, params["wk"], params["bk"]).reshape(B, S_src, n_heads, d)
    v = lin(source, params["wv"], params["bv"]).reshape(B, S_src, n_heads, d)
    q = q.transpose(0, 2, 1, 3); k = k.transpose(0, 2, 1, 3); v = v.transpose(0, 2, 1, 3)
    energy = jnp.einsum('bhqd,bhkd->bhqk', q, k) / jnp.sqrt(jnp.float32(d))
    attn = jax.nn.softmax(energy, axis=-1)
    ctx = jnp.einsum('bhqk,bhkd->bhqd', attn, v)
    ctx = ctx.transpose(0, 2, 1, 3).reshape(B, S_trg, H)
    x = lin(ctx, params["wo"], params["bo"])

    def ln(y):
        mu = jnp.mean(y, -1, keepdims=True)
        var = jnp.mean((y - mu) ** 2, -1, keepdims=True)
        return (y - mu) / jnp.sqrt(var + 1e-5) * params["gamma"][0] + params["beta"][0]

    t1 = ln(target + x)
    h1 = jnp.maximum(lin(t1, params["w1"], params["b1"]), 0.0)
    t2 = ln(t1 + lin(h1, params["w2"], params["b2"]))
    return t2, attn


if __name__ == "__main__":
    B, S_src, S_trg = 2, 16, 8
    hid_dim, n_heads, pf_dim = 32, 4, 64

    key = jax.random.PRNGKey(0)
    k_src, k_trg, k_par = jax.random.split(key, 3)
    source = jax.random.normal(k_src, (B, S_src, hid_dim), jnp.float32)
    target = jax.random.normal(k_trg, (B, S_trg, hid_dim), jnp.float32)
    params = init_params(k_par, hid_dim, pf_dim)

    out, attention = decoder_layer_zero(source, target, params, n_heads)
    jax.block_until_ready(out)
    jax.block_until_ready(attention)

    assert out.shape == (B, S_trg, hid_dim)
    assert attention.shape == (B, n_heads, S_trg, S_src)

    # Loose tolerances: matmul inputs go through bf16 on the MXU.
    ref_out, ref_attn = _reference(source, target, params, n_heads)
    assert np.max(np.abs(np.asarray(out) - np.asarray(ref_out))) < 5e-2
    assert np.max(np.abs(np.asarray(attention) - np.asarray(ref_attn))) < 1e-2

    print("KERNEL_OK")
</pallas_src>

<mosaic_0001>
module attributes {stable_mosaic.version = 11 : i64} {
  func.func @decoder_layer_zero_kernel(%arg0: i32, %arg1: i32, %arg2: memref<1x16x32xf32, #tpu.memory_space<vmem>>, %arg3: memref<1x8x32xf32, #tpu.memory_space<vmem>>, %arg4: memref<32x512xbf16, #tpu.memory_space<vmem>>, %arg5: memref<1x512xf32, #tpu.memory_space<vmem>>, %arg6: memref<32x1024xbf16, #tpu.memory_space<vmem>>, %arg7: memref<1x1024xf32, #tpu.memory_space<vmem>>, %arg8: memref<512x32xbf16, #tpu.memory_space<vmem>>, %arg9: memref<1x32xf32, #tpu.memory_space<vmem>>, %arg10: memref<32x64xbf16, #tpu.memory_space<vmem>>, %arg11: memref<1x64xf32, #tpu.memory_space<vmem>>, %arg12: memref<64x32xbf16, #tpu.memory_space<vmem>>, %arg13: memref<1x32xf32, #tpu.memory_space<vmem>>, %arg14: memref<1x32xf32, #tpu.memory_space<vmem>>, %arg15: memref<1x32xf32, #tpu.memory_space<vmem>>, %arg16: memref<1x8x32xf32, #tpu.memory_space<vmem>>, %arg17: memref<1x4x8x16xf32, #tpu.memory_space<vmem>>, %arg18: memref<1x16x1024xbf16, #tpu.memory_space<vmem>>, %arg19: memref<1x8x512xbf16, #tpu.memory_space<vmem>>) attributes {dimension_semantics = [#tpu.dimension_semantics<parallel>, #tpu.dimension_semantics<arbitrary>], iteration_bounds = array<i64: 2, 1>, scalar_prefetch = 0 : i64, scratch_operands = 2 : i64, tpu.core_type = #tpu.core_type<tc>, window_params = [{transform_indices = @transform_0, window_bounds = array<i64: 1, 16, 32>}, {transform_indices = @transform_1, window_bounds = array<i64: 1, 8, 32>}, {pipeline_mode = #tpu.pipeline_mode<synchronous>, transform_indices = @transform_2, window_bounds = array<i64: 32, 512>}, {pipeline_mode = #tpu.pipeline_mode<synchronous>, transform_indices = @transform_3, window_bounds = array<i64: 1, 512>}, {pipeline_mode = #tpu.pipeline_mode<synchronous>, transform_indices = @transform_4, window_bounds = array<i64: 32, 1024>}, {pipeline_mode = #tpu.pipeline_mode<synchronous>, transform_indices = @transform_5, window_bounds = array<i64: 1, 1024>}, {pipeline_mode = #tpu.pipeline_mode<synchronous>, transform_indices = @transform_6, window_bounds = array<i64: 512, 32>}, {pipeline_mode = #tpu.pipeline_mode<synchronous>, transform_indices = @transform_7, window_bounds = array<i64: 1, 32>}, {pipeline_mode = #tpu.pipeline_mode<synchronous>, transform_indices = @transform_8, window_bounds = array<i64: 32, 64>}, {pipeline_mode = #tpu.pipeline_mode<synchronous>, transform_indices = @transform_9, window_bounds = array<i64: 1, 64>}, {pipeline_mode = #tpu.pipeline_mode<synchronous>, transform_indices = @transform_10, window_bounds = array<i64: 64, 32>}, {pipeline_mode = #tpu.pipeline_mode<synchronous>, transform_indices = @transform_11, window_bounds = array<i64: 1, 32>}, {pipeline_mode = #tpu.pipeline_mode<synchronous>, transform_indices = @transform_12, window_bounds = array<i64: 1, 32>}, {pipeline_mode = #tpu.pipeline_mode<synchronous>, transform_indices = @transform_13, window_bounds = array<i64: 1, 32>}, {transform_indices = @transform_14, window_bounds = array<i64: 1, 8, 32>}, {transform_indices = @transform_15, window_bounds = array<i64: 1, 4, 8, 16>}]} {
    %c0_i32 = arith.constant 0 : i32
    %0 = arith.cmpi eq, %arg1, %c0_i32 : i32
    %1 = arith.extui %0 : i1 to i32
    %c0_i32_0 = arith.constant 0 : i32
    %2 = arith.cmpi ne, %1, %c0_i32_0 : i32
    scf.if %2 {
      %c0_103 = arith.constant 0 : index
      %c0_104 = arith.constant 0 : index
      %c0_105 = arith.constant 0 : index
      %165 = vector.load %arg2[%c0_103, %c0_104, %c0_105] : memref<1x16x32xf32, #tpu.memory_space<vmem>>, vector<1x16x32xf32>
      %166 = arith.truncf %165 : vector<1x16x32xf32> to vector<1x16x32xbf16>
      %167 = vector.shape_cast %166 : vector<1x16x32xbf16> to vector<16x32xbf16>
      %c0_106 = arith.constant 0 : index
      %c0_107 = arith.constant 0 : index
      %168 = vector.load %arg6[%c0_106, %c0_107] : memref<32x1024xbf16, #tpu.memory_space<vmem>>, vector<32x1024xbf16>
      %cst_108 = arith.constant dense<0.000000e+00> : vector<16x1024xf32>
      %169 = tpu.matmul %167, %168, %cst_108 {dimension_numbers = #tpu.dot_dimension_numbers<[1], [0], [0], [1], [0, 0, 1, 1], [], []>} : vector<16x32xbf16>, vector<32x1024xbf16>, vector<16x1024xf32> -> vector<16x1024xf32>
      %c0_109 = arith.constant 0 : index
      %c0_110 = arith.constant 0 : index
      %170 = vector.load %arg7[%c0_109, %c0_110] : memref<1x1024xf32, #tpu.memory_space<vmem>>, vector<1x1024xf32>
      %171 = vector.broadcast %170 : vector<1x1024xf32> to vector<16x1024xf32>
      %172 = arith.addf %169, %171 : vector<16x1024xf32>
      %173 = vector.shape_cast %172 : vector<16x1024xf32> to vector<1x16x1024xf32>
      %174 = arith.truncf %173 : vector<1x16x1024xf32> to vector<1x16x1024xbf16>
      %c0_111 = arith.constant 0 : index
      %c0_112 = arith.constant 0 : index
      %c0_113 = arith.constant 0 : index
      %175 = vector.load %arg18[%c0_111, %c0_112, %c0_113] : memref<1x16x1024xbf16, #tpu.memory_space<vmem>>, vector<1x16x1024xbf16>
      tpu.vector_store %arg18[%c0_111, %c0_112, %c0_113], %174 {strides = array<i32>} : memref<1x16x1024xbf16, #tpu.memory_space<vmem>>, vector<1x16x1024xbf16>,
    } else {
    }
    %c0 = arith.constant 0 : index
    %c0_1 = arith.constant 0 : index
    %c0_2 = arith.constant 0 : index
    %3 = vector.load %arg3[%c0, %c0_1, %c0_2] : memref<1x8x32xf32, #tpu.memory_space<vmem>>, vector<1x8x32xf32>
    %4 = vector.shape_cast %3 : vector<1x8x32xf32> to vector<8x32xf32>
    %5 = arith.truncf %4 : vector<8x32xf32> to vector<8x32xbf16>
    %c0_3 = arith.constant 0 : index
    %c0_4 = arith.constant 0 : index
    %6 = vector.load %arg4[%c0_3, %c0_4] : memref<32x512xbf16, #tpu.memory_space<vmem>>, vector<32x512xbf16>
    %cst = arith.constant dense<0.000000e+00> : vector<8x512xf32>
    %7 = tpu.matmul %5, %6, %cst {dimension_numbers = #tpu.dot_dimension_numbers<[1], [0], [0], [1], [0, 0, 1, 1], [], []>} : vector<8x32xbf16>, vector<32x512xbf16>, vector<8x512xf32> -> vector<8x512xf32>
    %c0_5 = arith.constant 0 : index
    %c0_6 = arith.constant 0 : index
    %8 = vector.load %arg5[%c0_5, %c0_6] : memref<1x512xf32, #tpu.memory_space<vmem>>, vector<1x512xf32>
    %9 = vector.broadcast %8 : vector<1x512xf32> to vector<8x512xf32>
    %10 = arith.addf %7, %9 : vector<8x512xf32>
    %cst_7 = arith.constant 0.353553385 : f32
    %11 = vector.broadcast %cst_7 : f32 to vector<8x512xf32>
    %12 = arith.mulf %10, %11 : vector<8x512xf32>
    %13 = vector.shape_cast %12 : vector<8x512xf32> to vector<1x8x512xf32>
    %14 = arith.truncf %13 : vector<1x8x512xf32> to vector<1x8x512xbf16>
    %c0_8 = arith.constant 0 : index
    %c0_9 = arith.constant 0 : index
    %15 = vector.load %arg14[%c0_8, %c0_9] : memref<1x32xf32, #tpu.memory_space<vmem>>, vector<1x32xf32>
    %c0_10 = arith.constant 0 : index
    %c0_11 = arith.constant 0 : index
    %16 = vector.load %arg15[%c0_10, %c0_11] : memref<1x32xf32, #tpu.memory_space<vmem>>, vector<1x32xf32>
    %17 = vector.extract_strided_slice %14 {offsets = [0, 0, 0], sizes = [1, 8, 128], strides = [1, 1, 1]} : vector<1x8x512xbf16> to vector<1x8x128xbf16>
    %c0_12 = arith.constant 0 : index
    %c0_13 = arith.constant 0 : index
    %c0_14 = arith.constant 0 : index
    %18 = vector.load %arg18[%c0_12, %c0_13, %c0_14] : memref<1x16x1024xbf16, #tpu.memory_space<vmem>>, vector<1x16x128xbf16>
    %c0_15 = arith.constant 0 : index
    %c0_16 = arith.constant 0 : index
    %c512 = arith.constant 512 : index
    %19 = vector.load %arg18[%c0_15, %c0_16, %c512] : memref<1x16x1024xbf16, #tpu.memory_space<vmem>>, vector<1x16x128xbf16>
    "tpu.trace_start"() <{level = 10 : i32, message = "bqd,bkd->bqk"}> : () -> ()
    %cst_17 = arith.constant dense<0.000000e+00> : vector<1x8x16xf32>
    %20 = tpu.matmul %17, %18, %cst_17 {dimension_numbers = #tpu.dot_dimension_numbers<[2], [2], [1], [1], [0, 0, 0, 1, 1, 1], [0], [0]>} : vector<1x8x128xbf16>, vector<1x16x128xbf16>, vector<1x8x16xf32> -> vector<1x8x16xf32>
    "tpu.trace_stop"() : () -> ()
    %cst_18 = arith.constant dense<0xFF800000> : vector<1x8xf32>
    %21 = vector.multi_reduction <maximumf>, %20, %cst_18 [2] : vector<1x8x16xf32> to vector<1x8xf32>
    %22 = vector.shape_cast %21 : vector<1x8xf32> to vector<1x8x1xf32>
    %23 = vector.broadcast %22 : vector<1x8x1xf32> to vector<1x8x16xf32>
    %24 = arith.subf %20, %23 : vector<1x8x16xf32>
    %25 = math.exp %24 : vector<1x8x16xf32>
    %cst_19 = arith.constant dense<0.000000e+00> : vector<1x8xf32>
    %26 = vector.multi_reduction <add>, %25, %cst_19 [2] : vector<1x8x16xf32> to vector<1x8xf32>
    %27 = vector.shape_cast %26 : vector<1x8xf32> to vector<1x8x1xf32>
    %28 = vector.broadcast %27 : vector<1x8x1xf32> to vector<1x8x16xf32>
    %29 = arith.divf %25, %28 : vector<1x8x16xf32>
    %30 = vector.shape_cast %29 : vector<1x8x16xf32> to vector<1x1x8x16xf32>
    %c0_20 = arith.constant 0 : index
    %c0_21 = arith.constant 0 : index
    %c0_22 = arith.constant 0 : index
    %c0_23 = arith.constant 0 : index
    %31 = vector.load %arg17[%c0_20, %c0_21, %c0_22, %c0_23] : memref<1x4x8x16xf32, #tpu.memory_space<vmem>>, vector<1x1x8x16xf32>
    tpu.vector_store %arg17[%c0_20, %c0_21, %c0_22, %c0_23], %30 {strides = array<i32>} : memref<1x4x8x16xf32, #tpu.memory_space<vmem>>, vector<1x1x8x16xf32>,
    %32 = arith.truncf %29 : vector<1x8x16xf32> to vector<1x8x16xbf16>
    "tpu.trace_start"() <{level = 10 : i32, message = "bqk,bkd->bqd"}> : () -> ()
    %cst_24 = arith.constant dense<0.000000e+00> : vector<1x8x128xf32>
    %33 = tpu.matmul %32, %19, %cst_24 {dimension_numbers = #tpu.dot_dimension_numbers<[2], [1], [1], [2], [0, 0, 0, 1, 1, 2], [0], [0]>} : vector<1x8x16xbf16>, vector<1x16x128xbf16>, vector<1x8x128xf32> -> vector<1x8x128xf32>
    "tpu.trace_stop"() : () -> ()
    %34 = arith.truncf %33 : vector<1x8x128xf32> to vector<1x8x128xbf16>
    %c0_25 = arith.constant 0 : index
    %c0_26 = arith.constant 0 : index
    %c0_27 = arith.constant 0 : index
    %35 = vector.load %arg19[%c0_25, %c0_26, %c0_27] : memref<1x8x512xbf16, #tpu.memory_space<vmem>>, vector<1x8x128xbf16>
    tpu.vector_store %arg19[%c0_25, %c0_26, %c0_27], %34 {strides = array<i32>} : memref<1x8x512xbf16, #tpu.memory_space<vmem>>, vector<1x8x128xbf16>,
    %36 = vector.extract_strided_slice %14 {offsets = [0, 0, 128], sizes = [1, 8, 128], strides = [1, 1, 1]} : vector<1x8x512xbf16> to vector<1x8x128xbf16>
    %c0_28 = arith.constant 0 : index
    %c0_29 = arith.constant 0 : index
    %c128 = arith.constant 128 : index
    %37 = vector.load %arg18[%c0_28, %c0_29, %c128] : memref<1x16x1024xbf16, #tpu.memory_space<vmem>>, vector<1x16x128xbf16>
    %c0_30 = arith.constant 0 : index
    %c0_31 = arith.constant 0 : index
    %c640 = arith.constant 640 : index
    %38 = vector.load %arg18[%c0_30, %c0_31, %c640] : memref<1x16x1024xbf16, #tpu.memory_space<vmem>>, vector<1x16x128xbf16>
    "tpu.trace_start"() <{level = 10 : i32, message = "bqd,bkd->bqk"}> : () -> ()
    %cst_32 = arith.constant dense<0.000000e+00> : vector<1x8x16xf32>
    %39 = tpu.matmul %36, %37, %cst_32 {dimension_numbers = #tpu.dot_dimension_numbers<[2], [2], [1], [1], [0, 0, 0, 1, 1, 1], [0], [0]>} : vector<1x8x128xbf16>, vector<1x16x128xbf16>, vector<1x8x16xf32> -> vector<1x8x16xf32>
    "tpu.trace_stop"() : () -> ()
    %cst_33 = arith.constant dense<0xFF800000> : vector<1x8xf32>
    %40 = vector.multi_reduction <maximumf>, %39, %cst_33 [2] : vector<1x8x16xf32> to vector<1x8xf32>
    %41 = vector.shape_cast %40 : vector<1x8xf32> to vector<1x8x1xf32>
    %42 = vector.broadcast %41 : vector<1x8x1xf32> to vector<1x8x16xf32>
    %43 = arith.subf %39, %42 : vector<1x8x16xf32>
    %44 = math.exp %43 : vector<1x8x16xf32>
    %cst_34 = arith.constant dense<0.000000e+00> : vector<1x8xf32>
    %45 = vector.multi_reduction <add>, %44, %cst_34 [2] : vector<1x8x16xf32> to vector<1x8xf32>
    %46 = vector.shape_cast %45 : vector<1x8xf32> to vector<1x8x1xf32>
    %47 = vector.broadcast %46 : vector<1x8x1xf32> to vector<1x8x16xf32>
    %48 = arith.divf %44, %47 : vector<1x8x16xf32>
    %49 = vector.shape_cast %48 : vector<1x8x16xf32> to vector<1x1x8x16xf32>
    %c0_35 = arith.constant 0 : index
    %c1 = arith.constant 1 : index
    %c0_36 = arith.constant 0 : index
    %c0_37 = arith.constant 0 : index
    %50 = vector.load %arg17[%c0_35, %c1, %c0_36, %c0_37] : memref<1x4x8x16xf32, #tpu.memory_space<vmem>>, vector<1x1x8x16xf32>
    tpu.vector_store %arg17[%c0_35, %c1, %c0_36, %c0_37], %49 {strides = array<i32>} : memref<1x4x8x16xf32, #tpu.memory_space<vmem>>, vector<1x1x8x16xf32>,
    %51 = arith.truncf %48 : vector<1x8x16xf32> to vector<1x8x16xbf16>
    "tpu.trace_start"() <{level = 10 : i32, message = "bqk,bkd->bqd"}> : () -> ()
    %cst_38 = arith.constant dense<0.000000e+00> : vector<1x8x128xf32>
    %52 = tpu.matmul %51, %38, %cst_38 {dimension_numbers = #tpu.dot_dimension_numbers<[2], [1], [1], [2], [0, 0, 0, 1, 1, 2], [0], [0]>} : vector<1x8x16xbf16>, vector<1x16x128xbf16>, vector<1x8x128xf32> -> vector<1x8x128xf32>
    "tpu.trace_stop"() : () -> ()
    %53 = arith.truncf %52 : vector<1x8x128xf32> to vector<1x8x128xbf16>
    %c0_39 = arith.constant 0 : index
    %c0_40 = arith.constant 0 : index
    %c128_41 = arith.constant 128 : index
    %54 = vector.load %arg19[%c0_39, %c0_40, %c128_41] : memref<1x8x512xbf16, #tpu.memory_space<vmem>>, vector<1x8x128xbf16>
    tpu.vector_store %arg19[%c0_39, %c0_40, %c128_41], %53 {strides = array<i32>} : memref<1x8x512xbf16, #tpu.memory_space<vmem>>, vector<1x8x128xbf16>,
    %55 = vector.extract_strided_slice %14 {offsets = [0, 0, 256], sizes = [1, 8, 128], strides = [1, 1, 1]} : vector<1x8x512xbf16> to vector<1x8x128xbf16>
    %c0_42 = arith.constant 0 : index
    %c0_43 = arith.constant 0 : index
    %c256 = arith.constant 256 : index
    %56 = vector.load %arg18[%c0_42, %c0_43, %c256] : memref<1x16x1024xbf16, #tpu.memory_space<vmem>>, vector<1x16x128xbf16>
    %c0_44 = arith.constant 0 : index
    %c0_45 = arith.constant 0 : index
    %c768 = arith.constant 768 : index
    %57 = vector.load %arg18[%c0_44, %c0_45, %c768] : memref<1x16x1024xbf16, #tpu.memory_space<vmem>>, vector<1x16x128xbf16>
    "tpu.trace_start"() <{level = 10 : i32, message = "bqd,bkd->bqk"}> : () -> ()
    %cst_46 = arith.constant dense<0.000000e+00> : vector<1x8x16xf32>
    %58 = tpu.matmul %55, %56, %cst_46 {dimension_numbers = #tpu.dot_dimension_numbers<[2], [2], [1], [1], [0, 0, 0, 1, 1, 1], [0], [0]>} : vector<1x8x128xbf16>, vector<1x16x128xbf16>, vector<1x8x16xf32> -> vector<1x8x16xf32>
    "tpu.trace_stop"() : () -> ()
    %cst_47 = arith.constant dense<0xFF800000> : vector<1x8xf32>
    %59 = vector.multi_reduction <maximumf>, %58, %cst_47 [2] : vector<1x8x16xf32> to vector<1x8xf32>
    %60 = vector.shape_cast %59 : vector<1x8xf32> to vector<1x8x1xf32>
    %61 = vector.broadcast %60 : vector<1x8x1xf32> to vector<1x8x16xf32>
    %62 = arith.subf %58, %61 : vector<1x8x16xf32>
    %63 = math.exp %62 : vector<1x8x16xf32>
    %cst_48 = arith.constant dense<0.000000e+00> : vector<1x8xf32>
    %64 = vector.multi_reduction <add>, %63, %cst_48 [2] : vector<1x8x16xf32> to vector<1x8xf32>
    %65 = vector.shape_cast %64 : vector<1x8xf32> to vector<1x8x1xf32>
    %66 = vector.broadcast %65 : vector<1x8x1xf32> to vector<1x8x16xf32>
    %67 = arith.divf %63, %66 : vector<1x8x16xf32>
    %68 = vector.shape_cast %67 : vector<1x8x16xf32> to vector<1x1x8x16xf32>
    %c0_49 = arith.constant 0 : index
    %c2 = arith.constant 2 : index
    %c0_50 = arith.constant 0 : index
    %c0_51 = arith.constant 0 : index
    %69 = vector.load %arg17[%c0_49, %c2, %c0_50, %c0_51] : memref<1x4x8x16xf32, #tpu.memory_space<vmem>>, vector<1x1x8x16xf32>
    tpu.vector_store %arg17[%c0_49, %c2, %c0_50, %c0_51], %68 {strides = array<i32>} : memref<1x4x8x16xf32, #tpu.memory_space<vmem>>, vector<1x1x8x16xf32>,
    %70 = arith.truncf %67 : vector<1x8x16xf32> to vector<1x8x16xbf16>
    "tpu.trace_start"() <{level = 10 : i32, message = "bqk,bkd->bqd"}> : () -> ()
    %cst_52 = arith.constant dense<0.000000e+00> : vector<1x8x128xf32>
    %71 = tpu.matmul %70, %57, %cst_52 {dimension_numbers = #tpu.dot_dimension_numbers<[2], [1], [1], [2], [0, 0, 0, 1, 1, 2], [0], [0]>} : vector<1x8x16xbf16>, vector<1x16x128xbf16>, vector<1x8x128xf32> -> vector<1x8x128xf32>
    "tpu.trace_stop"() : () -> ()
    %72 = arith.truncf %71 : vector<1x8x128xf32> to vector<1x8x128xbf16>
    %c0_53 = arith.constant 0 : index
    %c0_54 = arith.constant 0 : index
    %c256_55 = arith.constant 256 : index
    %73 = vector.load %arg19[%c0_53, %c0_54, %c256_55] : memref<1x8x512xbf16, #tpu.memory_space<vmem>>, vector<1x8x128xbf16>
    tpu.vector_store %arg19[%c0_53, %c0_54, %c256_55], %72 {strides = array<i32>} : memref<1x8x512xbf16, #tpu.memory_space<vmem>>, vector<1x8x128xbf16>,
    %74 = vector.extract_strided_slice %14 {offsets = [0, 0, 384], sizes = [1, 8, 128], strides = [1, 1, 1]} : vector<1x8x512xbf16> to vector<1x8x128xbf16>
    %c0_56 = arith.constant 0 : index
    %c0_57 = arith.constant 0 : index
    %c384 = arith.constant 384 : index
    %75 = vector.load %arg18[%c0_56, %c0_57, %c384] : memref<1x16x1024xbf16, #tpu.memory_space<vmem>>, vector<1x16x128xbf16>
    %c0_58 = arith.constant 0 : index
    %c0_59 = arith.constant 0 : index
    %c896 = arith.constant 896 : index
    %76 = vector.load %arg18[%c0_58, %c0_59, %c896] : memref<1x16x1024xbf16, #tpu.memory_space<vmem>>, vector<1x16x128xbf16>
    "tpu.trace_start"() <{level = 10 : i32, message = "bqd,bkd->bqk"}> : () -> ()
    %cst_60 = arith.constant dense<0.000000e+00> : vector<1x8x16xf32>
    %77 = tpu.matmul %74, %75, %cst_60 {dimension_numbers = #tpu.dot_dimension_numbers<[2], [2], [1], [1], [0, 0, 0, 1, 1, 1], [0], [0]>} : vector<1x8x128xbf16>, vector<1x16x128xbf16>, vector<1x8x16xf32> -> vector<1x8x16xf32>
    "tpu.trace_stop"() : () -> ()
    %cst_61 = arith.constant dense<0xFF800000> : vector<1x8xf32>
    %78 = vector.multi_reduction <maximumf>, %77, %cst_61 [2] : vector<1x8x16xf32> to vector<1x8xf32>
    %79 = vector.shape_cast %78 : vector<1x8xf32> to vector<1x8x1xf32>
    %80 = vector.broadcast %79 : vector<1x8x1xf32> to vector<1x8x16xf32>
    %81 = arith.subf %77, %80 : vector<1x8x16xf32>
    %82 = math.exp %81 : vector<1x8x16xf32>
    %cst_62 = arith.constant dense<0.000000e+00> : vector<1x8xf32>
    %83 = vector.multi_reduction <add>, %82, %cst_62 [2] : vector<1x8x16xf32> to vector<1x8xf32>
    %84 = vector.shape_cast %83 : vector<1x8xf32> to vector<1x8x1xf32>
    %85 = vector.broadcast %84 : vector<1x8x1xf32> to vector<1x8x16xf32>
    %86 = arith.divf %82, %85 : vector<1x8x16xf32>
    %87 = vector.shape_cast %86 : vector<1x8x16xf32> to vector<1x1x8x16xf32>
    %c0_63 = arith.constant 0 : index
    %c3 = arith.constant 3 : index
    %c0_64 = arith.constant 0 : index
    %c0_65 = arith.constant 0 : index
    %88 = vector.load %arg17[%c0_63, %c3, %c0_64, %c0_65] : memref<1x4x8x16xf32, #tpu.memory_space<vmem>>, vector<1x1x8x16xf32>
    tpu.vector_store %arg17[%c0_63, %c3, %c0_64, %c0_65], %87 {strides = array<i32>} : memref<1x4x8x16xf32, #tpu.memory_space<vmem>>, vector<1x1x8x16xf32>,
    %89 = arith.truncf %86 : vector<1x8x16xf32> to vector<1x8x16xbf16>
    "tpu.trace_start"() <{level = 10 : i32, message = "bqk,bkd->bqd"}> : () -> ()
    %cst_66 = arith.constant dense<0.000000e+00> : vector<1x8x128xf32>
    %90 = tpu.matmul %89, %76, %cst_66 {dimension_numbers = #tpu.dot_dimension_numbers<[2], [1], [1], [2], [0, 0, 0, 1, 1, 2], [0], [0]>} : vector<1x8x16xbf16>, vector<1x16x128xbf16>, vector<1x8x128xf32> -> vector<1x8x128xf32>
    "tpu.trace_stop"() : () -> ()
    %91 = arith.truncf %90 : vector<1x8x128xf32> to vector<1x8x128xbf16>
    %c0_67 = arith.constant 0 : index
    %c0_68 = arith.constant 0 : index
    %c384_69 = arith.constant 384 : index
    %92 = vector.load %arg19[%c0_67, %c0_68, %c384_69] : memref<1x8x512xbf16, #tpu.memory_space<vmem>>, vector<1x8x128xbf16>
    tpu.vector_store %arg19[%c0_67, %c0_68, %c384_69], %91 {strides = array<i32>} : memref<1x8x512xbf16, #tpu.memory_space<vmem>>, vector<1x8x128xbf16>,
    %c0_70 = arith.constant 0 : index
    %c0_71 = arith.constant 0 : index
    %c0_72 = arith.constant 0 : index
    %93 = vector.load %arg19[%c0_70, %c0_71, %c0_72] : memref<1x8x512xbf16, #tpu.memory_space<vmem>>, vector<1x8x512xbf16>
    %94 = vector.shape_cast %93 : vector<1x8x512xbf16> to vector<8x512xbf16>
    %c0_73 = arith.constant 0 : index
    %c0_74 = arith.constant 0 : index
    %95 = vector.load %arg8[%c0_73, %c0_74] : memref<512x32xbf16, #tpu.memory_space<vmem>>, vector<512x32xbf16>
    %cst_75 = arith.constant dense<0.000000e+00> : vector<8x32xf32>
    %96 = tpu.matmul %94, %95, %cst_75 {dimension_numbers = #tpu.dot_dimension_numbers<[1], [0], [0], [1], [0, 0, 1, 1], [], []>} : vector<8x512xbf16>, vector<512x32xbf16>, vector<8x32xf32> -> vector<8x32xf32>
    %c0_76 = arith.constant 0 : index
    %c0_77 = arith.constant 0 : index
    %97 = vector.load %arg9[%c0_76, %c0_77] : memref<1x32xf32, #tpu.memory_space<vmem>>, vector<1x32xf32>
    %98 = vector.broadcast %97 : vector<1x32xf32> to vector<8x32xf32>
    %99 = arith.addf %96, %98 : vector<8x32xf32>
    %100 = vector.shape_cast %3 : vector<1x8x32xf32> to vector<8x32xf32>
    %101 = arith.addf %100, %99 : vector<8x32xf32>
    %cst_78 = arith.constant dense<0.000000e+00> : vector<8xf32>
    %102 = vector.multi_reduction <add>, %101, %cst_78 [1] : vector<8x32xf32> to vector<8xf32>
    %103 = vector.shape_cast %102 : vector<8xf32> to vector<8x1xf32>
    %cst_79 = arith.constant 3.200000e+01 : f32
    %104 = vector.broadcast %cst_79 : f32 to vector<8x1xf32>
    %105 = arith.divf %103, %104 : vector<8x1xf32>
    %106 = vector.broadcast %105 : vector<8x1xf32> to vector<8x32xf32>
    %107 = arith.subf %101, %106 : vector<8x32xf32>
    %108 = arith.mulf %107, %107 : vector<8x32xf32>
    %cst_80 = arith.constant dense<0.000000e+00> : vector<8xf32>
    %109 = vector.multi_reduction <add>, %108, %cst_80 [1] : vector<8x32xf32> to vector<8xf32>
    %110 = vector.shape_cast %109 : vector<8xf32> to vector<8x1xf32>
    %cst_81 = arith.constant 3.200000e+01 : f32
    %111 = vector.broadcast %cst_81 : f32 to vector<8x1xf32>
    %112 = arith.divf %110, %111 : vector<8x1xf32>
    %113 = vector.broadcast %105 : vector<8x1xf32> to vector<8x32xf32>
    %114 = arith.subf %101, %113 : vector<8x32xf32>
    %cst_82 = arith.constant 9.99999974E-6 : f32
    %115 = vector.broadcast %cst_82 : f32 to vector<8x1xf32>
    %116 = arith.addf %112, %115 : vector<8x1xf32>
    %117 = math.rsqrt %116 : vector<8x1xf32>
    %118 = vector.broadcast %117 : vector<8x1xf32> to vector<8x32xf32>
    %119 = arith.mulf %114, %118 : vector<8x32xf32>
    %120 = vector.broadcast %15 : vector<1x32xf32> to vector<8x32xf32>
    %121 = arith.mulf %119, %120 : vector<8x32xf32>
    %122 = vector.broadcast %16 : vector<1x32xf32> to vector<8x32xf32>
    %123 = arith.addf %121, %122 : vector<8x32xf32>
    %124 = arith.truncf %123 : vector<8x32xf32> to vector<8x32xbf16>
    %cst_83 = arith.constant 0.000000e+00 : f32
    %125 = vector.broadcast %cst_83 : f32 to vector<8x32xf32>
    %c0_84 = arith.constant 0 : index
    %c0_85 = arith.constant 0 : index
    %126 = vector.load %arg10[%c0_84, %c0_85] : memref<32x64xbf16, #tpu.memory_space<vmem>>, vector<32x64xbf16>
    %cst_86 = arith.constant dense<0.000000e+00> : vector<8x64xf32>
    %127 = tpu.matmul %124, %126, %cst_86 {dimension_numbers = #tpu.dot_dimension_numbers<[1], [0], [0], [1], [0, 0, 1, 1], [], []>} : vector<8x32xbf16>, vector<32x64xbf16>, vector<8x64xf32> -> vector<8x64xf32>
    %c0_87 = arith.constant 0 : index
    %c0_88 = arith.constant 0 : index
    %128 = vector.load %arg11[%c0_87, %c0_88] : memref<1x64xf32, #tpu.memory_space<vmem>>, vector<1x64xf32>
    %129 = vector.broadcast %128 : vector<1x64xf32> to vector<8x64xf32>
    %130 = arith.addf %127, %129 : vector<8x64xf32>
    %cst_89 = arith.constant 0.000000e+00 : f32
    %131 = vector.broadcast %cst_89 : f32 to vector<8x64xf32>
    %132 = arith.maximumf %130, %131 : vector<8x64xf32>
    %133 = arith.truncf %132 : vector<8x64xf32> to vector<8x64xbf16>
    %c0_90 = arith.constant 0 : index
    %c0_91 = arith.constant 0 : index
    %134 = vector.load %arg12[%c0_90, %c0_91] : memref<64x32xbf16, #tpu.memory_space<vmem>>, vector<64x32xbf16>
    %cst_92 = arith.constant dense<0.000000e+00> : vector<8x32xf32>
    %135 = tpu.matmul %133, %134, %cst_92 {dimension_numbers = #tpu.dot_dimension_numbers<[1], [0], [0], [1], [0, 0, 1, 1], [], []>} : vector<8x64xbf16>, vector<64x32xbf16>, vector<8x32xf32> -> vector<8x32xf32>
    %136 = arith.addf %125, %135 : vector<8x32xf32>
    %c0_93 = arith.constant 0 : index
    %c0_94 = arith.constant 0 : index
    %137 = vector.load %arg13[%c0_93, %c0_94] : memref<1x32xf32, #tpu.memory_space<vmem>>, vector<1x32xf32>
    %138 = vector.broadcast %137 : vector<1x32xf32> to vector<8x32xf32>
    %139 = arith.addf %136, %138 : vector<8x32xf32>
    %140 = arith.addf %123, %139 : vector<8x32xf32>
    %cst_95 = arith.constant dense<0.000000e+00> : vector<8xf32>
    %141 = vector.multi_reduction <add>, %140, %cst_95 [1] : vector<8x32xf32> to vector<8xf32>
    %142 = vector.shape_cast %141 : vector<8xf32> to vector<8x1xf32>
    %cst_96 = arith.constant 3.200000e+01 : f32
    %143 = vector.broadcast %cst_96 : f32 to vector<8x1xf32>
    %144 = arith.divf %142, %143 : vector<8x1xf32>
    %145 = vector.broadcast %144 : vector<8x1xf32> to vector<8x32xf32>
    %146 = arith.subf %140, %145 : vector<8x32xf32>
    %147 = arith.mulf %146, %146 : vector<8x32xf32>
    %cst_97 = arith.constant dense<0.000000e+00> : vector<8xf32>
    %148 = vector.multi_reduction <add>, %147, %cst_97 [1] : vector<8x32xf32> to vector<8xf32>
    %149 = vector.shape_cast %148 : vector<8xf32> to vector<8x1xf32>
    %cst_98 = arith.constant 3.200000e+01 : f32
    %150 = vector.broadcast %cst_98 : f32 to vector<8x1xf32>
    %151 = arith.divf %149, %150 : vector<8x1xf32>
    %152 = vector.broadcast %144 : vector<8x1xf32> to vector<8x32xf32>
    %153 = arith.subf %140, %152 : vector<8x32xf32>
    %cst_99 = arith.constant 9.99999974E-6 : f32
    %154 = vector.broadcast %cst_99 : f32 to vector<8x1xf32>
    %155 = arith.addf %151, %154 : vector<8x1xf32>
    %156 = math.rsqrt %155 : vector<8x1xf32>
    %157 = vector.broadcast %156 : vector<8x1xf32> to vector<8x32xf32>
    %158 = arith.mulf %153, %157 : vector<8x32xf32>
    %159 = vector.broadcast %15 : vector<1x32xf32> to vector<8x32xf32>
    %160 = arith.mulf %158, %159 : vector<8x32xf32>
    %161 = vector.broadcast %16 : vector<1x32xf32> to vector<8x32xf32>
    %162 = arith.addf %160, %161 : vector<8x32xf32>
    %163 = vector.shape_cast %162 : vector<8x32xf32> to vector<1x8x32xf32>
    %c0_100 = arith.constant 0 : index
    %c0_101 = arith.constant 0 : index
    %c0_102 = arith.constant 0 : index
    %164 = vector.load %arg16[%c0_100, %c0_101, %c0_102] : memref<1x8x32xf32, #tpu.memory_space<vmem>>, vector<1x8x32xf32>
    tpu.vector_store %arg16[%c0_100, %c0_101, %c0_102], %163 {strides = array<i32>} : memref<1x8x32xf32, #tpu.memory_space<vmem>>, vector<1x8x32xf32>,
    return
  }
  func.func @transform_0(%arg0: i32, %arg1: i32) -> (i32, i32, i32) {
    %c0_i32 = arith.constant 0 : i32
    %c0_i32_0 = arith.constant 0 : i32
    %c0_i32_1 = arith.constant 0 : i32
    return %arg0, %c0_i32, %c0_i32_0 : i32, i32, i32
  }
  func.func @transform_1(%arg0: i32, %arg1: i32) -> (i32, i32, i32) {
    %c0_i32 = arith.constant 0 : i32
    %c0_i32_0 = arith.constant 0 : i32
    return %arg0, %arg1, %c0_i32 : i32, i32, i32
  }
  func.func @transform_2(%arg0: i32, %arg1: i32) -> (i32, i32) {
    %c0_i32 = arith.constant 0 : i32
    %c0_i32_0 = arith.constant 0 : i32
    %c0_i32_1 = arith.constant 0 : i32
    return %c0_i32, %c0_i32_0 : i32, i32
  }
  func.func @transform_3(%arg0: i32, %arg1: i32) -> (i32, i32) {
    %c0_i32 = arith.constant 0 : i32
    %c0_i32_0 = arith.constant 0 : i32
    %c0_i32_1 = arith.constant 0 : i32
    return %c0_i32, %c0_i32_0 : i32, i32
  }
  func.func @transform_4(%arg0: i32, %arg1: i32) -> (i32, i32) {
    %c0_i32 = arith.constant 0 : i32
    %c0_i32_0 = arith.constant 0 : i32
    %c0_i32_1 = arith.constant 0 : i32
    return %c0_i32, %c0_i32_0 : i32, i32
  }
  func.func @transform_5(%arg0: i32, %arg1: i32) -> (i32, i32) {
    %c0_i32 = arith.constant 0 : i32
    %c0_i32_0 = arith.constant 0 : i32
    %c0_i32_1 = arith.constant 0 : i32
    return %c0_i32, %c0_i32_0 : i32, i32
  }
  func.func @transform_6(%arg0: i32, %arg1: i32) -> (i32, i32) {
    %c0_i32 = arith.constant 0 : i32
    %c0_i32_0 = arith.constant 0 : i32
    %c0_i32_1 = arith.constant 0 : i32
    return %c0_i32, %c0_i32_0 : i32, i32
  }
  func.func @transform_7(%arg0: i32, %arg1: i32) -> (i32, i32) {
    %c0_i32 = arith.constant 0 : i32
    %c0_i32_0 = arith.constant 0 : i32
    %c0_i32_1 = arith.constant 0 : i32
    return %c0_i32, %c0_i32_0 : i32, i32
  }
  func.func @transform_8(%arg0: i32, %arg1: i32) -> (i32, i32) {
    %c0_i32 = arith.constant 0 : i32
    %c0_i32_0 = arith.constant 0 : i32
    %c0_i32_1 = arith.constant 0 : i32
    return %c0_i32, %c0_i32_0 : i32, i32
  }
  func.func @transform_9(%arg0: i32, %arg1: i32) -> (i32, i32) {
    %c0_i32 = arith.constant 0 : i32
    %c0_i32_0 = arith.constant 0 : i32
    %c0_i32_1 = arith.constant 0 : i32
    return %c0_i32, %c0_i32_0 : i32, i32
  }
  func.func @transform_10(%arg0: i32, %arg1: i32) -> (i32, i32) {
    %c0_i32 = arith.constant 0 : i32
    %c0_i32_0 = arith.constant 0 : i32
    %c0_i32_1 = arith.constant 0 : i32
    return %c0_i32, %c0_i32_0 : i32, i32
  }
  func.func @transform_11(%arg0: i32, %arg1: i32) -> (i32, i32) {
    %c0_i32 = arith.constant 0 : i32
    %c0_i32_0 = arith.constant 0 : i32
    %c0_i32_1 = arith.constant 0 : i32
    return %c0_i32, %c0_i32_0 : i32, i32
  }
  func.func @transform_12(%arg0: i32, %arg1: i32) -> (i32, i32) {
    %c0_i32 = arith.constant 0 : i32
    %c0_i32_0 = arith.constant 0 : i32
    %c0_i32_1 = arith.constant 0 : i32
    return %c0_i32, %c0_i32_0 : i32, i32
  }
  func.func @transform_13(%arg0: i32, %arg1: i32) -> (i32, i32) {
    %c0_i32 = arith.constant 0 : i32
    %c0_i32_0 = arith.constant 0 : i32
    %c0_i32_1 = arith.constant 0 : i32
    return %c0_i32, %c0_i32_0 : i32, i32
  }
  func.func @transform_14(%arg0: i32, %arg1: i32) -> (i32, i32, i32) {
    %c0_i32 = arith.constant 0 : i32
    %c0_i32_0 = arith.constant 0 : i32
    return %arg0, %arg1, %c0_i32 : i32, i32, i32
  }
  func.func @transform_15(%arg0: i32, %arg1: i32) -> (i32, i32, i32, i32) {
    %c0_i32 = arith.constant 0 : i32
    %c0_i32_0 = arith.constant 0 : i32
    %c0_i32_1 = arith.constant 0 : i32
    return %arg0, %c0_i32, %arg1, %c0_i32_0 : i32, i32, i32, i32
  }
}

</mosaic_0001>

<llo_original>
// kernel: tpu_custom_call.1
$region0: #{tpu_custom_call.1}
  #allocation0 [shape = 'u32[]', space=smem, size = 0x4, offset = 0x4, fixed_abs, tag = 'smem constant byte address 0x4 - core index']
  #allocation1 [shape = 'u32[72,128]{1,0:T(1,128)}', space=vmem, size = 0x9000, scoped, tag = 'internal scratch']
  #allocation2 [shape = 'bf16[1,16,1024]{2,1,0:T(8,128)(2,1)}', space=vmem, size = 0x8000, scoped, tag = 'scratch operand']
  #allocation3 [shape = 'bf16[1,8,512]{2,1,0:T(8,128)(2,1)}', space=vmem, size = 0x2000, scoped, tag = 'scratch operand']
  %s0 = inlined_call_operand.vmem [shape: f32[2,16,32], index: 0, kind: input, shape index: {}]
  %s1 = inlined_call_operand.vmem [shape: f32[2,8,32], index: 1, kind: input, shape index: {}]
  %s2 = inlined_call_operand.vmem [shape: bf16[32,512], index: 2, kind: input, shape index: {}]
  %s3 = inlined_call_operand.vmem [shape: f32[1,512], index: 3, kind: input, shape index: {}]
  %s4 = inlined_call_operand.vmem [shape: bf16[32,1024], index: 4, kind: input, shape index: {}]
  %s5 = inlined_call_operand.vmem [shape: f32[1,1024], index: 5, kind: input, shape index: {}]
  %s6 = inlined_call_operand.vmem [shape: bf16[512,32], index: 6, kind: input, shape index: {}]
  %s7 = inlined_call_operand.vmem [shape: f32[1,32], index: 7, kind: input, shape index: {}]
  %s8 = inlined_call_operand.vmem [shape: bf16[32,64], index: 8, kind: input, shape index: {}]
  %s9 = inlined_call_operand.vmem [shape: f32[1,64], index: 9, kind: input, shape index: {}]
  %s10 = inlined_call_operand.vmem [shape: bf16[64,32], index: 10, kind: input, shape index: {}]
  %s11 = inlined_call_operand.vmem [shape: f32[1,32], index: 11, kind: input, shape index: {}]
  %s12 = inlined_call_operand.vmem [shape: f32[1,32], index: 12, kind: input, shape index: {}]
  %s13 = inlined_call_operand.vmem [shape: f32[1,32], index: 13, kind: input, shape index: {}]
  %s14 = inlined_call_operand.hbm [shape: f32[2,8,32], index: 14, kind: output, shape index: {0}]
  %s15 = inlined_call_operand.hbm [shape: f32[2,4,8,16], index: 15, kind: output, shape index: {1}]
  %16 = xla_tuple %s14, %s15
  %s17 = sld [smem:[#allocation0]]
  $region101: #{tpu_custom_call.1} parent=0
    _
  %s19 = ssub.s32 1, %s17
  %s20 = scalar_select 0, %s19, %s17
  $region1: #{tpu_custom_call.1} parent=0
    #allocation4 [shape = 'u8[8192]{0}', space=vmem, size = 0x2000, scoped, tag = 'output window, operand 0']
    #allocation5 [shape = 's32[2]{0}', space=sflag, size = 0x8, scoped, tag = 'scoped memory for tpu_custom_call.1']
    #allocation6 [shape = 'u8[32768]{0}', space=vmem, size = 0x8000, scoped, tag = 'output window, operand 1']
    #allocation7 [shape = 's32[2]{0}', space=sflag, size = 0x8, scoped, tag = 'scoped memory for tpu_custom_call.1']
    %21 = vsyncpa [#allocation5], 0
    %s22 = scalar_lea.sflag [#allocation5], 1
    %23 = vsyncpa %s22, 0
    %24 = vsyncpa [#allocation7], 0
    %s25 = scalar_lea.sflag [#allocation7], 1
    %26 = vsyncpa %s25, 0
    loop: start=0, step=1, limit=4
    $region2: #{tpu_custom_call.1} parent=1 // loop_pre_header
      _
    $region3: #{tpu_custom_call.1} parent=1 // loop_header
      %s28 = sphi 0, %s32
      %p29 = scmp.ge.s32.totalorder %s28, 4
      %s35 = sphi 0, %s47
      %s36 = sphi 0, %s43
      %s37 = sphi 0, %s35
      %s38 = sphi 0, %s36
      %s39 = sphi 0, %s37
      %s40 = sphi 0, %s38
      %s50 = sphi 0, %s52
      %s53 = sphi 0, %s50
      %s54 = sphi 0, %s53
      %s70 = sphi 0, %s54
      %s78 = sphi 0, %s80
      %s81 = sphi 0, %s78
      %s82 = sphi 0, %s81
      %s98 = sphi 0, %s82
      %s102 = sphi 0, %s102
      %s104 = sphi 0, %s102
      %s105 = sphi 0, %s104
      %s119 = sphi 0, %s105
      %s123 = sphi 0, %s123
      %s125 = sphi 0, %s123
      %s126 = sphi 0, %s125
      %s140 = sphi 0, %s126
      %s144 = sphi 0, %s144
      %s146 = sphi 0, %s144
      %s147 = sphi 0, %s146
      %s161 = sphi 0, %s147
      %s165 = sphi 0, %s165
      %s167 = sphi 0, %s165
      %s168 = sphi 0, %s167
      %s182 = sphi 0, %s168
      %s186 = sphi 0, %s186
      %s188 = sphi 0, %s186
      %s189 = sphi 0, %s188
      %s203 = sphi 0, %s189
      %s207 = sphi 0, %s207
      %s209 = sphi 0, %s207
      %s210 = sphi 0, %s209
      %s224 = sphi 0, %s210
      %s228 = sphi 0, %s228
      %s230 = sphi 0, %s228
      %s231 = sphi 0, %s230
      %s245 = sphi 0, %s231
      %s249 = sphi 0, %s249
      %s251 = sphi 0, %s249
      %s252 = sphi 0, %s251
      %s266 = sphi 0, %s252
      %s270 = sphi 0, %s270
      %s272 = sphi 0, %s270
      %s273 = sphi 0, %s272
      %s287 = sphi 0, %s273
      %s291 = sphi 0, %s291
      %s293 = sphi 0, %s291
      %s294 = sphi 0, %s293
      %s308 = sphi 0, %s294
      %s312 = sphi 0, %s312
      %s314 = sphi 0, %s312
      %s315 = sphi 0, %s314
      %s329 = sphi 0, %s315
      %s333 = sphi 0, %s333
      %s335 = sphi 0, %s333
      %s336 = sphi 0, %s335
      %s350 = sphi 0, %s336
      %s358 = sphi 0, %s360
      %s361 = sphi 0, %s358
      %s362 = sphi 0, %s361
      %s378 = sphi 0, %s362
      %s386 = sphi 0, %s388
      %s389 = sphi 0, %s386
      %s390 = sphi 0, %s389
      %s406 = sphi 0, %s390
    $region4: #{tpu_custom_call.1} parent=1 // loop_header_branch
      %31 = sbr.rel (%p29) target = $region8
    $region5: #{tpu_custom_call.1} parent=1 // loop_body
      %s33 = ssub.s32 %s28, 1
      %s34 = ssub.s32 %s28, 2
      %s41 = sadd.s32 1, %s36
      %p42 = scmp.ge.s32.totalorder %s41, 1
      %s43 = scalar_select %p42, 0, %s41
      %s44 = sadd.s32 1, %s35
      %s45 = scalar_select %p42, %s44, %s35
      %p46 = scmp.ge.s32.totalorder %s45, 2
      %s47 = scalar_select %p46, 0, %s45
      %s48 = ssub.s32 %s35, %s47
      %p49 = scmp.eq.s32.totalorder %s48, 0
      %s51 = sadd.s32 %s50, 1
      %s52 = scalar_select %p49, %s50, %s51
      %p55 = pneg %p49
      %p56 = scmp.eq.s32.totalorder %s28, 1
      %p57 = por %p55, %p56
      %p58 = scmp.ne.s32.totalorder %s50, %s53
      %p59 = scmp.eq.s32.totalorder %s28, 0
      %p60 = por %p58, %p59
      %p61 = scmp.ne.s32.totalorder %s50, %s53
      %p62 = scmp.eq.s32.totalorder %s33, 1
      %p63 = por %p61, %p62
      %p64 = scmp.ne.s32.totalorder %s53, %s54
      %p65 = scmp.eq.s32.totalorder %s33, 0
      %p66 = por %p64, %p65
      %p67 = scmp.ne.s32.totalorder %s53, %s54
      %p68 = scmp.eq.s32.totalorder %s34, 1
      %p69 = por %p67, %p68
      %p71 = scmp.ne.s32.totalorder %s54, %s70
      %p72 = scmp.eq.s32.totalorder %s34, 0
      %p73 = por %p71, %p72
      %s74 = ssub.s32 %s35, %s47
      %s75 = ssub.s32 %s36, %s43
      %s76 = sor.u32 %s74, %s75
      %p77 = scmp.eq.s32.totalorder %s76, 0
      %s79 = sadd.s32 %s78, 1
      %s80 = scalar_select %p77, %s78, %s79
      %p83 = pneg %p77
      %p84 = scmp.eq.s32.totalorder %s28, 1
      %p85 = por %p83, %p84
      %p86 = scmp.ne.s32.totalorder %s78, %s81
      %p87 = scmp.eq.s32.totalorder %s28, 0
      %p88 = por %p86, %p87
      %p89 = scmp.ne.s32.totalorder %s78, %s81
      %p90 = scmp.eq.s32.totalorder %s33, 1
      %p91 = por %p89, %p90
      %p92 = scmp.ne.s32.totalorder %s81, %s82
      %p93 = scmp.eq.s32.totalorder %s33, 0
      %p94 = por %p92, %p93
      %p95 = scmp.ne.s32.totalorder %s81, %s82
      %p96 = scmp.eq.s32.totalorder %s34, 1
      %p97 = por %p95, %p96
      %p99 = scmp.ne.s32.totalorder %s82, %s98
      %p100 = scmp.eq.s32.totalorder %s34, 0
      %p101 = por %p99, %p100
      %s103 = sadd.s32 %s102, 1
      %p106 = scmp.eq.s32.totalorder %s28, 1
      %p107 = scmp.ne.s32.totalorder %s102, %s104
      %p108 = scmp.eq.s32.totalorder %s28, 0
      %p109 = por %p107, %p108
      %p110 = scmp.ne.s32.totalorder %s102, %s104
      %p111 = scmp.eq.s32.totalorder %s33, 1
      %p112 = por %p110, %p111
      %p113 = scmp.ne.s32.totalorder %s104, %s105
      %p114 = scmp.eq.s32.totalorder %s33, 0
      %p115 = por %p113, %p114
      %p116 = scmp.ne.s32.totalorder %s104, %s105
      %p117 = scmp.eq.s32.totalorder %s34, 1
      %p118 = por %p116, %p117
      %p120 = scmp.ne.s32.totalorder %s105, %s119
      %p121 = scmp.eq.s32.totalorder %s34, 0
      %p122 = por %p120, %p121
      %s124 = sadd.s32 %s123, 1
      %p127 = scmp.eq.s32.totalorder %s28, 1
      %p128 = scmp.ne.s32.totalorder %s123, %s125
      %p129 = scmp.eq.s32.totalorder %s28, 0
      %p130 = por %p128, %p129
      %p131 = scmp.ne.s32.totalorder %s123, %s125
      %p132 = scmp.eq.s32.totalorder %s33, 1
      %p133 = por %p131, %p132
      %p134 = scmp.ne.s32.totalorder %s125, %s126
      %p135 = scmp.eq.s32.totalorder %s33, 0
      %p136 = por %p134, %p135
      %p137 = scmp.ne.s32.totalorder %s125, %s126
      %p138 = scmp.eq.s32.totalorder %s34, 1
      %p139 = por %p137, %p138
      %p141 = scmp.ne.s32.totalorder %s126, %s140
      %p142 = scmp.eq.s32.totalorder %s34, 0
      %p143 = por %p141, %p142
      %s145 = sadd.s32 %s144, 1
      %p148 = scmp.eq.s32.totalorder %s28, 1
      %p149 = scmp.ne.s32.totalorder %s144, %s146
      %p150 = scmp.eq.s32.totalorder %s28, 0
      %p151 = por %p149, %p150
      %p152 = scmp.ne.s32.totalorder %s144, %s146
      %p153 = scmp.eq.s32.totalorder %s33, 1
      %p154 = por %p152, %p153
      %p155 = scmp.ne.s32.totalorder %s146, %s147
      %p156 = scmp.eq.s32.totalorder %s33, 0
      %p157 = por %p155, %p156
      %p158 = scmp.ne.s32.totalorder %s146, %s147
      %p159 = scmp.eq.s32.totalorder %s34, 1
      %p160 = por %p158, %p159
      %p162 = scmp.ne.s32.totalorder %s147, %s161
      %p163 = scmp.eq.s32.totalorder %s34, 0
      %p164 = por %p162, %p163
      %s166 = sadd.s32 %s165, 1
      %p169 = scmp.eq.s32.totalorder %s28, 1
      %p170 = scmp.ne.s32.totalorder %s165, %s167
      %p171 = scmp.eq.s32.totalorder %s28, 0
      %p172 = por %p170, %p171
      %p173 = scmp.ne.s32.totalorder %s165, %s167
      %p174 = scmp.eq.s32.totalorder %s33, 1
      %p175 = por %p173, %p174
      %p176 = scmp.ne.s32.totalorder %s167, %s168
      %p177 = scmp.eq.s32.totalorder %s33, 0
      %p178 = por %p176, %p177
      %p179 = scmp.ne.s32.totalorder %s167, %s168
      %p180 = scmp.eq.s32.totalorder %s34, 1
      %p181 = por %p179, %p180
      %p183 = scmp.ne.s32.totalorder %s168, %s182
      %p184 = scmp.eq.s32.totalorder %s34, 0
      %p185 = por %p183, %p184
      %s187 = sadd.s32 %s186, 1
      %p190 = scmp.eq.s32.totalorder %s28, 1
      %p191 = scmp.ne.s32.totalorder %s186, %s188
      %p192 = scmp.eq.s32.totalorder %s28, 0
      %p193 = por %p191, %p192
      %p194 = scmp.ne.s32.totalorder %s186, %s188
      %p195 = scmp.eq.s32.totalorder %s33, 1
      %p196 = por %p194, %p195
      %p197 = scmp.ne.s32.totalorder %s188, %s189
      %p198 = scmp.eq.s32.totalorder %s33, 0
      %p199 = por %p197, %p198
      %p200 = scmp.ne.s32.totalorder %s188, %s189
      %p201 = scmp.eq.s32.totalorder %s34, 1
      %p202 = por %p200, %p201
      %p204 = scmp.ne.s32.totalorder %s189, %s203
      %p205 = scmp.eq.s32.totalorder %s34, 0
      %p206 = por %p204, %p205
      %s208 = sadd.s32 %s207, 1
      %p211 = scmp.eq.s32.totalorder %s28, 1
      %p212 = scmp.ne.s32.totalorder %s207, %s209
      %p213 = scmp.eq.s32.totalorder %s28, 0
      %p214 = por %p212, %p213
      %p215 = scmp.ne.s32.totalorder %s207, %s209
      %p216 = scmp.eq.s32.totalorder %s33, 1
      %p217 = por %p215, %p216
      %p218 = scmp.ne.s32.totalorder %s209, %s210
      %p219 = scmp.eq.s32.totalorder %s33, 0
      %p220 = por %p218, %p219
      %p221 = scmp.ne.s32.totalorder %s209, %s210
      %p222 = scmp.eq.s32.totalorder %s34, 1
      %p223 = por %p221, %p222
      %p225 = scmp.ne.s32.totalorder %s210, %s224
      %p226 = scmp.eq.s32.totalorder %s34, 0
      %p227 = por %p225, %p226
      %s229 = sadd.s32 %s228, 1
      %p232 = scmp.eq.s32.totalorder %s28, 1
      %p233 = scmp.ne.s32.totalorder %s228, %s230
      %p234 = scmp.eq.s32.totalorder %s28, 0
      %p235 = por %p233, %p234
      %p236 = scmp.ne.s32.totalorder %s228, %s230
      %p237 = scmp.eq.s32.totalorder %s33, 1
      %p238 = por %p236, %p237
      %p239 = scmp.ne.s32.totalorder %s230, %s231
      %p240 = scmp.eq.s32.totalorder %s33, 0
      %p241 = por %p239, %p240
      %p242 = scmp.ne.s32.totalorder %s230, %s231
      %p243 = scmp.eq.s32.totalorder %s34, 1
      %p244 = por %p242, %p243
      %p246 = scmp.ne.s32.totalorder %s231, %s245
      %p247 = scmp.eq.s32.totalorder %s34, 0
      %p248 = por %p246, %p247
      %s250 = sadd.s32 %s249, 1
      %p253 = scmp.eq.s32.totalorder %s28, 1
      %p254 = scmp.ne.s32.totalorder %s249, %s251
      %p255 = scmp.eq.s32.totalorder %s28, 0
      %p256 = por %p254, %p255
      %p257 = scmp.ne.s32.totalorder %s249, %s251
      %p258 = scmp.eq.s32.totalorder %s33, 1
      %p259 = por %p257, %p258
      %p260 = scmp.ne.s32.totalorder %s251, %s252
      %p261 = scmp.eq.s32.totalorder %s33, 0
      %p262 = por %p260, %p261
      %p263 = scmp.ne.s32.totalorder %s251, %s252
      %p264 = scmp.eq.s32.totalorder %s34, 1
      %p265 = por %p263, %p264
      %p267 = scmp.ne.s32.totalorder %s252, %s266
      %p268 = scmp.eq.s32.totalorder %s34, 0
      %p269 = por %p267, %p268
      %s271 = sadd.s32 %s270, 1
      %p274 = scmp.eq.s32.totalorder %s28, 1
      %p275 = scmp.ne.s32.totalorder %s270, %s272
      %p276 = scmp.eq.s32.totalorder %s28, 0
      %p277 = por %p275, %p276
      %p278 = scmp.ne.s32.totalorder %s270, %s272
      %p279 = scmp.eq.s32.totalorder %s33, 1
      %p280 = por %p278, %p279
      %p281 = scmp.ne.s32.totalorder %s272, %s273
      %p282 = scmp.eq.s32.totalorder %s33, 0
      %p283 = por %p281, %p282
      %p284 = scmp.ne.s32.totalorder %s272, %s273
      %p285 = scmp.eq.s32.totalorder %s34, 1
      %p286 = por %p284, %p285
      %p288 = scmp.ne.s32.totalorder %s273, %s287
      %p289 = scmp.eq.s32.totalorder %s34, 0
      %p290 = por %p288, %p289
      %s292 = sadd.s32 %s291, 1
      %p295 = scmp.eq.s32.totalorder %s28, 1
      %p296 = scmp.ne.s32.totalorder %s291, %s293
      %p297 = scmp.eq.s32.totalorder %s28, 0
      %p298 = por %p296, %p297
      %p299 = scmp.ne.s32.totalorder %s291, %s293
      %p300 = scmp.eq.s32.totalorder %s33, 1
      %p301 = por %p299, %p300
      %p302 = scmp.ne.s32.totalorder %s293, %s294
      %p303 = scmp.eq.s32.totalorder %s33, 0
      %p304 = por %p302, %p303
      %p305 = scmp.ne.s32.totalorder %s293, %s294
      %p306 = scmp.eq.s32.totalorder %s34, 1
      %p307 = por %p305, %p306
      %p309 = scmp.ne.s32.totalorder %s294, %s308
      %p310 = scmp.eq.s32.totalorder %s34, 0
      %p311 = por %p309, %p310
      %s313 = sadd.s32 %s312, 1
      %p316 = scmp.eq.s32.totalorder %s28, 1
      %p317 = scmp.ne.s32.totalorder %s312, %s314
      %p318 = scmp.eq.s32.totalorder %s28, 0
      %p319 = por %p317, %p318
      %p320 = scmp.ne.s32.totalorder %s312, %s314
      %p321 = scmp.eq.s32.totalorder %s33, 1
      %p322 = por %p320, %p321
      %p323 = scmp.ne.s32.totalorder %s314, %s315
      %p324 = scmp.eq.s32.totalorder %s33, 0
      %p325 = por %p323, %p324
      %p326 = scmp.ne.s32.totalorder %s314, %s315
      %p327 = scmp.eq.s32.totalorder %s34, 1
      %p328 = por %p326, %p327
      %p330 = scmp.ne.s32.totalorder %s315, %s329
      %p331 = scmp.eq.s32.totalorder %s34, 0
      %p332 = por %p330, %p331
      %s334 = sadd.s32 %s333, 1
      %p337 = scmp.eq.s32.totalorder %s28, 1
      %p338 = scmp.ne.s32.totalorder %s333, %s335
      %p339 = scmp.eq.s32.totalorder %s28, 0
      %p340 = por %p338, %p339
      %p341 = scmp.ne.s32.totalorder %s333, %s335
      %p342 = scmp.eq.s32.totalorder %s33, 1
      %p343 = por %p341, %p342
      %p344 = scmp.ne.s32.totalorder %s335, %s336
      %p345 = scmp.eq.s32.totalorder %s33, 0
      %p346 = por %p344, %p345
      %p347 = scmp.ne.s32.totalorder %s335, %s336
      %p348 = scmp.eq.s32.totalorder %s34, 1
      %p349 = por %p347, %p348
      %p351 = scmp.ne.s32.totalorder %s336, %s350
      %p352 = scmp.eq.s32.totalorder %s34, 0
      %p353 = por %p351, %p352
      %s354 = ssub.s32 %s35, %s47
      %s355 = ssub.s32 %s36, %s43
      %s356 = sor.u32 %s354, %s355
      %p357 = scmp.eq.s32.totalorder %s356, 0
      %s359 = sadd.s32 %s358, 1
      %s360 = scalar_select %p357, %s358, %s359
      %p363 = pneg %p357
      %p364 = scmp.eq.s32.totalorder %s28, 1
      %p365 = por %p363, %p364
      %p366 = scmp.ne.s32.totalorder %s358, %s361
      %p367 = scmp.eq.s32.totalorder %s28, 0
      %p368 = por %p366, %p367
      %p369 = scmp.ne.s32.totalorder %s358, %s361
      %p370 = scmp.eq.s32.totalorder %s33, 1
      %p371 = por %p369, %p370
      %p372 = scmp.ne.s32.totalorder %s361, %s362
      %p373 = scmp.eq.s32.totalorder %s33, 0
      %p374 = por %p372, %p373
      %p375 = scmp.ne.s32.totalorder %s361, %s362
      %p376 = scmp.eq.s32.totalorder %s34, 1
      %p377 = por %p375, %p376
      %p379 = scmp.ne.s32.totalorder %s362, %s378
      %p380 = scmp.eq.s32.totalorder %s34, 0
      %p381 = por %p379, %p380
      %s382 = ssub.s32 %s35, %s47
      %s383 = ssub.s32 %s36, %s43
      %s384 = sor.u32 %s382, %s383
      %p385 = scmp.eq.s32.totalorder %s384, 0
      %s387 = sadd.s32 %s386, 1
      %s388 = scalar_select %p385, %s386, %s387
      %p391 = pneg %p385
      %p392 = scmp.eq.s32.totalorder %s28, 1
      %p393 = por %p391, %p392
      %p394 = scmp.ne.s32.totalorder %s386, %s389
      %p395 = scmp.eq.s32.totalorder %s28, 0
      %p396 = por %p394, %p395
      %p397 = scmp.ne.s32.totalorder %s386, %s389
      %p398 = scmp.eq.s32.totalorder %s33, 1
      %p399 = por %p397, %p398
      %p400 = scmp.ne.s32.totalorder %s389, %s390
      %p401 = scmp.eq.s32.totalorder %s33, 0
      %p402 = por %p400, %p401
      %p403 = scmp.ne.s32.totalorder %s389, %s390
      %p404 = scmp.eq.s32.totalorder %s34, 1
      %p405 = por %p403, %p404
      %p407 = scmp.ne.s32.totalorder %s390, %s406
      %p408 = scmp.eq.s32.totalorder %s34, 0
      %p409 = por %p407, %p408
      %p410 = scmp.le.s32.totalorder 1, %s28
      %p411 = scmp.lt.s32.totalorder %s28, 3
      %p412 = pnand %p410, %p411
      %p413 = pneg %p412
      // Predicated region
      $region9: #{tpu_custom_call.1} parent=5 // pred_check
        _
      $region10: #{tpu_custom_call.1} parent=5 // pred_check_branch
        %415 = sbr.rel (%p412) target = $region12
      $region11: #{tpu_custom_call.1} parent=5 // pred_region
        %s416 = ssub.s32 %s28, 1
        // Predicated region
        $region13: #{tpu_custom_call.1} parent=11 // pred_check
          %p417 = pneg %p115
        $region14: #{tpu_custom_call.1} parent=11 // pred_check_branch
          %419 = sbr.rel (%p417) target = $region16
        $region15: #{tpu_custom_call.1} parent=11 // pred_region
          _
        $region16: #{tpu_custom_call.1} parent=11 // pred_fallthru
          _
        // Predicated region
        $region17: #{tpu_custom_call.1} parent=11 // pred_check
          %p420 = pneg %p136
        $region18: #{tpu_custom_call.1} parent=11 // pred_check_branch
          %422 = sbr.rel (%p420) target = $region20
        $region19: #{tpu_custom_call.1} parent=11 // pred_region
          _
        $region20: #{tpu_custom_call.1} parent=11 // pred_fallthru
          _
        // Predicated region
        $region21: #{tpu_custom_call.1} parent=11 // pred_check
          %p423 = pneg %p157
        $region22: #{tpu_custom_call.1} parent=11 // pred_check_branch
          %425 = sbr.rel (%p423) target = $region24
        $region23: #{tpu_custom_call.1} parent=11 // pred_region
          _
        $region24: #{tpu_custom_call.1} parent=11 // pred_fallthru
          _
        // Predicated region
        $region25: #{tpu_custom_call.1} parent=11 // pred_check
          %p426 = pneg %p178
        $region26: #{tpu_custom_call.1} parent=11 // pred_check_branch
          %428 = sbr.rel (%p426) target = $region28
        $region27: #{tpu_custom_call.1} parent=11 // pred_region
          _
        $region28: #{tpu_custom_call.1} parent=11 // pred_fallthru
          _
        // Predicated region
        $region29: #{tpu_custom_call.1} parent=11 // pred_check
          %p429 = pneg %p199
        $region30: #{tpu_custom_call.1} parent=11 // pred_check_branch
          %431 = sbr.rel (%p429) target = $region32
        $region31: #{tpu_custom_call.1} parent=11 // pred_region
          _
        $region32: #{tpu_custom_call.1} parent=11 // pred_fallthru
          _
        // Predicated region
        $region33: #{tpu_custom_call.1} parent=11 // pred_check
          %p432 = pneg %p220
        $region34: #{tpu_custom_call.1} parent=11 // pred_check_branch
          %434 = sbr.rel (%p432) target = $region36
        $region35: #{tpu_custom_call.1} parent=11 // pred_region
          _
        $region36: #{tpu_custom_call.1} parent=11 // pred_fallthru
          _
        // Predicated region
        $region37: #{tpu_custom_call.1} parent=11 // pred_check
          %p435 = pneg %p241
        $region38: #{tpu_custom_call.1} parent=11 // pred_check_branch
          %437 = sbr.rel (%p435) target = $region40
        $region39: #{tpu_custom_call.1} parent=11 // pred_region
          _
        $region40: #{tpu_custom_call.1} parent=11 // pred_fallthru
          _
        // Predicated region
        $region41: #{tpu_custom_call.1} parent=11 // pred_check
          %p438 = pneg %p262
        $region42: #{tpu_custom_call.1} parent=11 // pred_check_branch
          %440 = sbr.rel (%p438) target = $region44
        $region43: #{tpu_custom_call.1} parent=11 // pred_region
          _
        $region44: #{tpu_custom_call.1} parent=11 // pred_fallthru
          _
        // Predicated region
        $region45: #{tpu_custom_call.1} parent=11 // pred_check
          %p441 = pneg %p283
        $region46: #{tpu_custom_call.1} parent=11 // pred_check_branch
          %443 = sbr.rel (%p441) target = $region48
        $region47: #{tpu_custom_call.1} parent=11 // pred_region
          _
        $region48: #{tpu_custom_call.1} parent=11 // pred_fallthru
          _
        // Predicated region
        $region49: #{tpu_custom_call.1} parent=11 // pred_check
          %p444 = pneg %p304
        $region50: #{tpu_custom_call.1} parent=11 // pred_check_branch
          %446 = sbr.rel (%p444) target = $region52
        $region51: #{tpu_custom_call.1} parent=11 // pred_region
          _
        $region52: #{tpu_custom_call.1} parent=11 // pred_fallthru
          _
        // Predicated region
        $region53: #{tpu_custom_call.1} parent=11 // pred_check
          %p447 = pneg %p325
        $region54: #{tpu_custom_call.1} parent=11 // pred_check_branch
          %449 = sbr.rel (%p447) target = $region56
        $region55: #{tpu_custom_call.1} parent=11 // pred_region
          _
        $region56: #{tpu_custom_call.1} parent=11 // pred_fallthru
          _
        // Predicated region
        $region57: #{tpu_custom_call.1} parent=11 // pred_check
          %p450 = pneg %p346
        $region58: #{tpu_custom_call.1} parent=11 // pred_check_branch
          %452 = sbr.rel (%p450) target = $region60
        $region59: #{tpu_custom_call.1} parent=11 // pred_region
          _
        $region60: #{tpu_custom_call.1} parent=11 // pred_fallthru
          _
      $region12: #{tpu_custom_call.1} parent=5 // pred_fallthru
        _
      %p453 = scmp.lt.s32.totalorder %s28, 2
      // Predicated region
      $region61: #{tpu_custom_call.1} parent=5 // pred_check
        %p454 = pneg %p453
      $region62: #{tpu_custom_call.1} parent=5 // pred_check_branch
        %456 = sbr.rel (%p454) target = $region64
      $region63: #{tpu_custom_call.1} parent=5 // pred_region
        // Predicated region
        $region65: #{tpu_custom_call.1} parent=63 // pred_check
          %p457 = pneg %p60
        $region66: #{tpu_custom_call.1} parent=63 // pred_check_branch
          %459 = sbr.rel (%p457) target = $region68
        $region67: #{tpu_custom_call.1} parent=63 // pred_region
          %p460 = scmp.lt.s32.totalorder %s35, 1
          %s461 = scalar_select %p460, %s35, 1
          %s462 = smul.addr %s461, 2
          %s463 = smul.addr %s462, 8
          %s464 = scalar_lea.vmem %s0, %s463
        $region68: #{tpu_custom_call.1} parent=63 // pred_fallthru
          _
        // Predicated region
        $region69: #{tpu_custom_call.1} parent=63 // pred_check
          %p465 = pneg %p88
        $region70: #{tpu_custom_call.1} parent=63 // pred_check_branch
          %467 = sbr.rel (%p465) target = $region72
        $region71: #{tpu_custom_call.1} parent=63 // pred_region
          %p468 = scmp.lt.s32.totalorder %s35, 1
          %s469 = scalar_select %p468, %s35, 1
          %p470 = scmp.lt.s32.totalorder %s36, 0
          %s471 = scalar_select %p470, %s36, 0
          %s472 = sadd.s32 %s471, %s469
          %s473 = smul.addr %s472, 8
          %s474 = scalar_lea.vmem %s1, %s473
        $region72: #{tpu_custom_call.1} parent=63 // pred_fallthru
          _
      $region64: #{tpu_custom_call.1} parent=5 // pred_fallthru
        _
      %p475 = scmp.le.s32.totalorder 1, %s28
      %p476 = scmp.lt.s32.totalorder %s28, 3
      %p477 = pnand %p475, %p476
      %p478 = pneg %p477
      // Predicated region
      $region73: #{tpu_custom_call.1} parent=5 // pred_check
        _
      $region74: #{tpu_custom_call.1} parent=5 // pred_check_branch
        %480 = sbr.rel (%p477) target = $region76
      $region75: #{tpu_custom_call.1} parent=5 // pred_region
        %s481 = ssub.s32 %s28, 1
        %p482 = scmp.lt.s32.totalorder %s37, 1
        %s483 = scalar_select %p482, %s37, 1
        %s484 = smul.addr %s483, 2
        %s485 = smul.addr %s484, 8
        %s486 = scalar_lea.vmem %s0, %s485
        %p487 = pneg %p66
        %p488 = pneg %p63
        %p489 = scmp.lt.s32.totalorder %s37, 1
        %s490 = scalar_select %p489, %s37, 1
        %p491 = scmp.lt.s32.totalorder %s38, 0
        %s492 = scalar_select %p491, %s38, 0
        %s493 = sadd.s32 %s492, %s490
        %s494 = smul.addr %s493, 8
        %s495 = scalar_lea.vmem %s1, %s494
        %p496 = pneg %p94
        %p497 = pneg %p91
        %p498 = pneg %p115
        %p499 = pneg %p112
        %p500 = pneg %p136
        %p501 = pneg %p133
        %p502 = pneg %p157
        %p503 = pneg %p154
        %p504 = pneg %p178
        %p505 = pneg %p175
        %p506 = pneg %p199
        %p507 = pneg %p196
        %p508 = pneg %p220
        %p509 = pneg %p217
        %p510 = pneg %p241
        %p511 = pneg %p238
        %p512 = pneg %p262
        %p513 = pneg %p259
        %p514 = pneg %p283
        %p515 = pneg %p280
        %p516 = pneg %p304
        %p517 = pneg %p301
        %p518 = pneg %p325
        %p519 = pneg %p322
        %p520 = pneg %p346
        %p521 = pneg %p343
        %p522 = pneg %p374
        %p523 = pneg %p371
        %s524 = sand.u32 %s361, 1
        %s525 = scalar_lea.sflag [#allocation5], %s524
        %s526 = sand.u32 %s361, 1
        %s527 = smul.addr %s526, 8
        %s528 = scalar_lea.vmem [#allocation4], %s527
        %p529 = pneg %p402
        %p530 = pneg %p399
        %s531 = sand.u32 %s389, 1
        %s532 = scalar_lea.sflag [#allocation7], %s531
        %s533 = sand.u32 %s389, 1
        %s534 = smul.addr %s533, 32
        %s535 = scalar_lea.vmem [#allocation6], %s534
        %p536 = scmp.lt.s32.totalorder %s37, 1
        %s537 = scalar_select %p536, %s37, 1
        %s538 = smul.addr %s537, 2
        %s539 = smul.addr %s538, 8
        %s540 = scalar_lea.vmem %s0, %s539
        %p541 = scmp.lt.s32.totalorder %s37, 1
        %s542 = scalar_select %p541, %s37, 1
        %p543 = scmp.lt.s32.totalorder %s38, 0
        %s544 = scalar_select %p543, %s38, 0
        %s545 = sadd.s32 %s544, %s542
        %s546 = smul.addr %s545, 8
        %s547 = scalar_lea.vmem %s1, %s546
        %p549 = scmp.eq.s32.totalorder %s38, 0
        // Predicated region
        $region77: #{tpu_custom_call.1} parent=75 // pred_check
          %p550 = pneg %p549
        $region78: #{tpu_custom_call.1} parent=75 // pred_check_branch
          %552 = sbr.rel (%p550) target = $region80
        $region79: #{tpu_custom_call.1} parent=75 // pred_region
          %v553 = vld [vmem:[%s540] sm:$0xff]
          %v554 = vld [vmem:[%s540 + $0x8] sm:$0xff]
          %v555 = vpack.c.bf16 %v553, %v553
          %v556 = vpack.c.bf16 %v554, %v554
          %v557 = vld [vmem:[%s4] sm:$0xff]
          %v558 = vld [vmem:[%s4 + $0x8] sm:$0xff]
          %v559 = vld [vmem:[%s4 + $0x10] sm:$0xff]
          %v560 = vld [vmem:[%s4 + $0x18] sm:$0xff]
          %v561 = vld [vmem:[%s4 + $0x20] sm:$0xff]
          %v562 = vld [vmem:[%s4 + $0x28] sm:$0xff]
          %v563 = vld [vmem:[%s4 + $0x30] sm:$0xff]
          %v564 = vld [vmem:[%s4 + $0x38] sm:$0xff]
          %v565 = vld [vmem:[%s4 + $0x40] sm:$0xff]
          %v566 = vld [vmem:[%s4 + $0x48] sm:$0xff]
          %v567 = vld [vmem:[%s4 + $0x50] sm:$0xff]
          %v568 = vld [vmem:[%s4 + $0x58] sm:$0xff]
          %v569 = vld [vmem:[%s4 + $0x60] sm:$0xff]
          %v570 = vld [vmem:[%s4 + $0x68] sm:$0xff]
          %v571 = vld [vmem:[%s4 + $0x70] sm:$0xff]
          %v572 = vld [vmem:[%s4 + $0x78] sm:$0xff]
          %v573 = vld [vmem:[%s5] sm:$0xff]
          %v575 = vperm.slane %v573, 0
          %v576 = vperm.slane %v573, 1
          %v577 = vperm.slane %v573, 2
          %v578 = vperm.slane %v573, 3
          %v579 = vperm.slane %v573, 4
          %v580 = vperm.slane %v573, 5
          %v581 = vperm.slane %v573, 6
          %v582 = vperm.slane %v573, 7
          %v593 = vunpack.c.l.b16 %v555
          %v594 = vunpack.c.l.b16 %v556
          %v595 = vpack.c.b16 %v594, %v593
          %v612 = vunpack.c.l.b16 %v557
          %v613 = vunpack.c.h.b16 %v557
          %v614 = vunpack.c.l.b16 %v558
          %v615 = vunpack.c.h.b16 %v558
          %v616 = vunpack.c.l.b16 %v559
          %v617 = vunpack.c.h.b16 %v559
          %v618 = vunpack.c.l.b16 %v560
          %v619 = vunpack.c.h.b16 %v560
          %v620 = vunpack.c.l.b16 %v561
          %v621 = vunpack.c.h.b16 %v561
          %v622 = vunpack.c.l.b16 %v562
          %v623 = vunpack.c.h.b16 %v562
          %v624 = vunpack.c.l.b16 %v563
          %v625 = vunpack.c.h.b16 %v563
          %v626 = vunpack.c.l.b16 %v564
          %v627 = vunpack.c.h.b16 %v564
          %v628 = vunpack.c.l.b16 %v565
          %v629 = vunpack.c.h.b16 %v565
          %v630 = vunpack.c.l.b16 %v566
          %v631 = vunpack.c.h.b16 %v566
          %v632 = vunpack.c.l.b16 %v567
          %v633 = vunpack.c.h.b16 %v567
          %v634 = vunpack.c.l.b16 %v568
          %v635 = vunpack.c.h.b16 %v568
          %v636 = vunpack.c.l.b16 %v569
          %v637 = vunpack.c.h.b16 %v569
          %v638 = vunpack.c.l.b16 %v570
          %v639 = vunpack.c.h.b16 %v570
          %v640 = vunpack.c.l.b16 %v571
          %v641 = vunpack.c.h.b16 %v571
          %v642 = vunpack.c.l.b16 %v572
          %v643 = vunpack.c.h.b16 %v572
          %v644 = vpack.c.b16 %v620, %v612
          %v645 = vpack.c.b16 %v621, %v613
          %v646 = vpack.c.b16 %v622, %v614
          %v647 = vpack.c.b16 %v623, %v615
          %v648 = vpack.c.b16 %v624, %v616
          %v649 = vpack.c.b16 %v625, %v617
          %v650 = vpack.c.b16 %v626, %v618
          %v651 = vpack.c.b16 %v627, %v619
          %v652 = vpack.c.b16 %v636, %v628
          %v653 = vpack.c.b16 %v637, %v629
          %v654 = vpack.c.b16 %v638, %v630
          %v655 = vpack.c.b16 %v639, %v631
          %v656 = vpack.c.b16 %v640, %v632
          %v657 = vpack.c.b16 %v641, %v633
          %v658 = vpack.c.b16 %v642, %v634
          %v659 = vpack.c.b16 %v643, %v635
          %vm676 = vcmask 261120
          %v678 = vsel %vm676, %v595, 0
          %680 = vmatpush.bf16.msra.mxu0 0
          %681 = vmatpush.bf16.msra.mxu0 0
          %682 = vmatpush.bf16.msra.mxu0 0
          %683 = vmatpush.bf16.msra.mxu0 0
          %684 = vmatpush.bf16.msra.mxu0 0
          %685 = vmatpush.bf16.msra.mxu0 0
          %686 = vmatpush.bf16.msra.mxu0 %v652
          %687 = vmatpush.bf16.msra.mxu0 %v644
          %688 = vmatmul.bf16.gmra.mxu0 %v678
          %v689 = vpop.f32.mrf.mxu0
          %v690 = vadd.f32 %v575, %v689
          %v691 = vpop.f32.mrf.mxu0
          %v692 = vadd.f32 %v575, %v691
          %693 = vdwg.mxu0
          %694 = vmatpush.bf16.msra.mxu0 0
          %695 = vmatpush.bf16.msra.mxu0 0
          %696 = vmatpush.bf16.msra.mxu0 0
          %697 = vmatpush.bf16.msra.mxu0 0
          %698 = vmatpush.bf16.msra.mxu0 0
          %699 = vmatpush.bf16.msra.mxu0 0
          %700 = vmatpush.bf16.msra.mxu0 %v653
          %701 = vmatpush.bf16.msra.mxu0 %v645
          %702 = vmatmul.bf16.gmra.mxu0 %v678
          %v703 = vpop.f32.mrf.mxu0
          %v704 = vadd.f32 %v576, %v703
          %v705 = vpop.f32.mrf.mxu0
          %v706 = vadd.f32 %v576, %v705
          %707 = vdwg.mxu0
          %708 = vmatpush.bf16.msra.mxu0 0
          %709 = vmatpush.bf16.msra.mxu0 0
          %710 = vmatpush.bf16.msra.mxu0 0
          %711 = vmatpush.bf16.msra.mxu0 0
          %712 = vmatpush.bf16.msra.mxu0 0
          %713 = vmatpush.bf16.msra.mxu0 0
          %714 = vmatpush.bf16.msra.mxu0 %v654
          %715 = vmatpush.bf16.msra.mxu0 %v646
          %716 = vmatmul.bf16.gmra.mxu0 %v678
          %v717 = vpop.f32.mrf.mxu0
          %v718 = vadd.f32 %v577, %v717
          %v719 = vpop.f32.mrf.mxu0
          %v720 = vadd.f32 %v577, %v719
          %721 = vdwg.mxu0
          %722 = vmatpush.bf16.msra.mxu0 0
          %723 = vmatpush.bf16.msra.mxu0 0
          %724 = vmatpush.bf16.msra.mxu0 0
          %725 = vmatpush.bf16.msra.mxu0 0
          %726 = vmatpush.bf16.msra.mxu0 0
          %727 = vmatpush.bf16.msra.mxu0 0
          %728 = vmatpush.bf16.msra.mxu0 %v655
          %729 = vmatpush.bf16.msra.mxu0 %v647
          %730 = vmatmul.bf16.gmra.mxu0 %v678
          %v731 = vpop.f32.mrf.mxu0
          %v732 = vadd.f32 %v578, %v731
          %v733 = vpop.f32.mrf.mxu0
          %v734 = vadd.f32 %v578, %v733
          %735 = vdwg.mxu0
          %736 = vmatpush.bf16.msra.mxu0 0
          %737 = vmatpush.bf16.msra.mxu0 0
          %738 = vmatpush.bf16.msra.mxu0 0
          %739 = vmatpush.bf16.msra.mxu0 0
          %740 = vmatpush.bf16.msra.mxu0 0
          %741 = vmatpush.bf16.msra.mxu0 0
          %742 = vmatpush.bf16.msra.mxu0 %v656
          %743 = vmatpush.bf16.msra.mxu0 %v648
          %744 = vmatmul.bf16.gmra.mxu0 %v678
          %v745 = vpop.f32.mrf.mxu0
          %v746 = vadd.f32 %v579, %v745
          %v747 = vpop.f32.mrf.mxu0
          %v748 = vadd.f32 %v579, %v747
          %749 = vdwg.mxu0
          %750 = vmatpush.bf16.msra.mxu0 0
          %751 = vmatpush.bf16.msra.mxu0 0
          %752 = vmatpush.bf16.msra.mxu0 0
          %753 = vmatpush.bf16.msra.mxu0 0
          %754 = vmatpush.bf16.msra.mxu0 0
          %755 = vmatpush.bf16.msra.mxu0 0
          %756 = vmatpush.bf16.msra.mxu0 %v657
          %757 = vmatpush.bf16.msra.mxu0 %v649
          %758 = vmatmul.bf16.gmra.mxu0 %v678
          %v759 = vpop.f32.mrf.mxu0
          %v760 = vadd.f32 %v580, %v759
          %v761 = vpop.f32.mrf.mxu0
          %v762 = vadd.f32 %v580, %v761
          %763 = vdwg.mxu0
          %764 = vmatpush.bf16.msra.mxu0 0
          %765 = vmatpush.bf16.msra.mxu0 0
          %766 = vmatpush.bf16.msra.mxu0 0
          %767 = vmatpush.bf16.msra.mxu0 0
          %768 = vmatpush.bf16.msra.mxu0 0
          %769 = vmatpush.bf16.msra.mxu0 0
          %770 = vmatpush.bf16.msra.mxu0 %v658
          %771 = vmatpush.bf16.msra.mxu0 %v650
          %772 = vmatmul.bf16.gmra.mxu0 %v678
          %v773 = vpop.f32.mrf.mxu0
          %v774 = vadd.f32 %v581, %v773
          %v775 = vpop.f32.mrf.mxu0
          %v776 = vadd.f32 %v581, %v775
          %777 = vdwg.mxu0
          %778 = vmatpush.bf16.msra.mxu0 0
          %779 = vmatpush.bf16.msra.mxu0 0
          %780 = vmatpush.bf16.msra.mxu0 0
          %781 = vmatpush.bf16.msra.mxu0 0
          %782 = vmatpush.bf16.msra.mxu0 0
          %783 = vmatpush.bf16.msra.mxu0 0
          %784 = vmatpush.bf16.msra.mxu0 %v659
          %785 = vmatpush.bf16.msra.mxu0 %v651
          %786 = vmatmul.bf16.gmra.mxu0 %v678
          %v787 = vpop.f32.mrf.mxu0
          %v788 = vadd.f32 %v582, %v787
          %v789 = vpop.f32.mrf.mxu0
          %v790 = vadd.f32 %v582, %v789
          %791 = vdwg.mxu0
          %v792 = vpack.c.bf16 %v704, %v690
          %v793 = vpack.c.bf16 %v732, %v718
          %v794 = vpack.c.bf16 %v760, %v746
          %v795 = vpack.c.bf16 %v788, %v774
          %v796 = vpack.c.bf16 %v706, %v692
          %v797 = vpack.c.bf16 %v734, %v720
          %v798 = vpack.c.bf16 %v762, %v748
          %v799 = vpack.c.bf16 %v790, %v776
          %800 = vst [vmem:[#allocation2] sm:$0xff] %v792
          %801 = vst [vmem:[#allocation2 + $0x8] sm:$0xff] %v793
          %802 = vst [vmem:[#allocation2 + $0x10] sm:$0xff] %v794
          %803 = vst [vmem:[#allocation2 + $0x18] sm:$0xff] %v795
          %804 = vst [vmem:[#allocation2 + $0x20] sm:$0xff] %v796
          %805 = vst [vmem:[#allocation2 + $0x28] sm:$0xff] %v797
          %806 = vst [vmem:[#allocation2 + $0x30] sm:$0xff] %v798
          %807 = vst [vmem:[#allocation2 + $0x38] sm:$0xff] %v799
        $region80: #{tpu_custom_call.1} parent=75 // pred_fallthru
          _
        %v808 = vld [vmem:[%s547] sm:$0xff]
        %v809 = vpack.c.bf16 %v808, %v808
        %v810 = vld [vmem:[%s2] sm:$0xff]
        %v811 = vld [vmem:[%s2 + $0x8] sm:$0xff]
        %v812 = vld [vmem:[%s2 + $0x10] sm:$0xff]
        %v813 = vld [vmem:[%s2 + $0x18] sm:$0xff]
        %v814 = vld [vmem:[%s2 + $0x20] sm:$0xff]
        %v815 = vld [vmem:[%s2 + $0x28] sm:$0xff]
        %v816 = vld [vmem:[%s2 + $0x30] sm:$0xff]
        %v817 = vld [vmem:[%s2 + $0x38] sm:$0xff]
        %v818 = vld [vmem:[%s3] sm:$0xf]
        %v820 = vperm.slane %v818, 0
        %v821 = vperm.slane %v818, 1
        %v822 = vperm.slane %v818, 2
        %v823 = vperm.slane %v818, 3
        %v836 = vunpack.c.l.b16 %v810
        %v837 = vunpack.c.h.b16 %v810
        %v838 = vunpack.c.l.b16 %v811
        %v839 = vunpack.c.h.b16 %v811
        %v840 = vunpack.c.l.b16 %v812
        %v841 = vunpack.c.h.b16 %v812
        %v842 = vunpack.c.l.b16 %v813
        %v843 = vunpack.c.h.b16 %v813
        %v844 = vunpack.c.l.b16 %v814
        %v845 = vunpack.c.h.b16 %v814
        %v846 = vunpack.c.l.b16 %v815
        %v847 = vunpack.c.h.b16 %v815
        %v848 = vunpack.c.l.b16 %v816
        %v849 = vunpack.c.h.b16 %v816
        %v850 = vunpack.c.l.b16 %v817
        %v851 = vunpack.c.h.b16 %v817
        %v852 = vpack.c.b16 %v840, %v836
        %v853 = vpack.c.b16 %v841, %v837
        %v854 = vpack.c.b16 %v842, %v838
        %v855 = vpack.c.b16 %v843, %v839
        %v856 = vpack.c.b16 %v848, %v844
        %v857 = vpack.c.b16 %v849, %v845
        %v858 = vpack.c.b16 %v850, %v846
        %v859 = vpack.c.b16 %v851, %v847
        %vm868 = vcmask 261120
        %v870 = vsel %vm868, %v809, 0
        %872 = vmatpush.bf16.msra.mxu0 0
        %873 = vmatpush.bf16.msra.mxu0 0
        %874 = vmatpush.bf16.msra.mxu0 0
        %875 = vmatpush.bf16.msra.mxu0 0
        %876 = vmatpush.bf16.msra.mxu0 0
        %877 = vmatpush.bf16.msra.mxu0 0
        %878 = vmatpush.bf16.msra.mxu0 %v856
        %879 = vmatpush.bf16.msra.mxu0 %v852
        %880 = vmatmul.bf16.gmra.mxu0 %v870
        %v881 = vpop.f32.mrf.mxu0
        %v882 = vadd.f32 %v820, %v881
        %v883 = vpop.f32.mrf.mxu0
        %884 = vdwg.mxu0
        %885 = vmatpush.bf16.msra.mxu0 0
        %886 = vmatpush.bf16.msra.mxu0 0
        %887 = vmatpush.bf16.msra.mxu0 0
        %888 = vmatpush.bf16.msra.mxu0 0
        %889 = vmatpush.bf16.msra.mxu0 0
        %890 = vmatpush.bf16.msra.mxu0 0
        %891 = vmatpush.bf16.msra.mxu0 %v857
        %892 = vmatpush.bf16.msra.mxu0 %v853
        %893 = vmatmul.bf16.gmra.mxu0 %v870
        %v894 = vpop.f32.mrf.mxu0
        %v895 = vadd.f32 %v821, %v894
        %v896 = vpop.f32.mrf.mxu0
        %897 = vdwg.mxu0
        %898 = vmatpush.bf16.msra.mxu0 0
        %899 = vmatpush.bf16.msra.mxu0 0
        %900 = vmatpush.bf16.msra.mxu0 0
        %901 = vmatpush.bf16.msra.mxu0 0
        %902 = vmatpush.bf16.msra.mxu0 0
        %903 = vmatpush.bf16.msra.mxu0 0
        %904 = vmatpush.bf16.msra.mxu0 %v858
        %905 = vmatpush.bf16.msra.mxu0 %v854
        %906 = vmatmul.bf16.gmra.mxu0 %v870
        %v907 = vpop.f32.mrf.mxu0
        %v908 = vadd.f32 %v822, %v907
        %v909 = vpop.f32.mrf.mxu0
        %910 = vdwg.mxu0
        %911 = vmatpush.bf16.msra.mxu0 0
        %912 = vmatpush.bf16.msra.mxu0 0
        %913 = vmatpush.bf16.msra.mxu0 0
        %914 = vmatpush.bf16.msra.mxu0 0
        %915 = vmatpush.bf16.msra.mxu0 0
        %916 = vmatpush.bf16.msra.mxu0 0
        %917 = vmatpush.bf16.msra.mxu0 %v859
        %918 = vmatpush.bf16.msra.mxu0 %v855
        %919 = vmatmul.bf16.gmra.mxu0 %v870
        %v920 = vpop.f32.mrf.mxu0
        %v921 = vadd.f32 %v823, %v920
        %v922 = vpop.f32.mrf.mxu0
        %923 = vdwg.mxu0
        %v924 = vmul.f32 %v882, 0.35355338
        %v925 = vmul.f32 %v895, 0.35355338
        %v926 = vmul.f32 %v908, 0.35355338
        %v927 = vmul.f32 %v921, 0.35355338
        %v928 = vpack.c.bf16 %v925, %v924
        %v929 = vpack.c.bf16 %v927, %v926
        %v930 = vld [vmem:[%s12] sm:$0x1]
        %v931 = vld [vmem:[%s13] sm:$0x1]
        %v932 = vld [vmem:[#allocation2] sm:$0xf]
        %v933 = vld [vmem:[#allocation2 + $0x20] sm:$0xf]
        %v934 = vld [vmem:[#allocation2 + $0x10] sm:$0xf]
        %v935 = vld [vmem:[#allocation2 + $0x30] sm:$0xf]
        %v938 = vunpack.c.l.b16 %v932
        %v939 = vunpack.c.l.b16 %v933
        %v940 = vpack.c.b16 %v939, %v938
        %942 = vmatpush.bf16.xpose.msra.mxu0 0
        %943 = vmatpush.bf16.xpose.msra.mxu0 0
        %944 = vmatpush.bf16.xpose.msra.mxu0 0
        %945 = vmatpush.bf16.xpose.msra.mxu0 0
        %946 = vmatpush.bf16.xpose.msra.mxu0 0
        %947 = vmatpush.bf16.xpose.msra.mxu0 0
        %948 = vmatpush.bf16.xpose.msra.mxu0 0
        %949 = vmatpush.bf16.xpose.msra.mxu0 %v940
        %950 = vmatmul.bf16.gmra.mxu0 %v928
        %v951 = vpop.f32.mrf.mxu0
        %v952 = vadd.f32 0.0, %v951
        %v953 = vpop.f32.mrf.mxu0
        %954 = vdwg.mxu0
        %vm955 = vcmask 130048
        %v956 = vsel %vm955, %v952, -inf
        %957 = vmax.xlane.f32.xlu0 %v956
        %v958 = vpop.xlane.xlu0 %957
        %v959 = vsub.f32 %v952, %v958
        %v960 = vmul.f32 %v959, 1.442695
        %v961 = vpow.pop %v960
        %v962 = vsel %vm955, %v961, 0.0
        %963 = vadd.xlane.f32.xlu0 %v962
        %v964 = vpop.xlane.xlu0 %963
        %v965 = vrcp.pop %v964
        %v966 = vmul.f32 %v964, %v965
        %v967 = vsub.f32 1.0, %v966
        %v968 = vmul.f32 %v965, %v967
        %v969 = vadd.f32 %v965, %v968
        %vm970 = vweird.f32 %v964
        %vm971 = vweird.f32 %v965
        %vm972 = vmor %vm970, %vm971
        %v973 = vsel %vm972, %v965, %v969
        %v974 = vand.u32 2147483647, %v964
        %vm975 = vcmp.eq.f32.partialorder %v974, 8.507059e+37
        %v976 = vand.u32 %v964, 2147483648
        %v977 = vor.u32 1.1754944e-38, %v976
        %v978 = vsel %vm975, %v977, %v973
        %v979 = vmul.f32 %v961, %v978
        %980 = vst.msk [vmem:[%s535] sm:$0xff] %vm955, %v979
        %v981 = vpack.c.bf16 %v979, %v979
        %v984 = vunpack.c.l.b16 %v934
        %v985 = vunpack.c.l.b16 %v935
        %v986 = vpack.c.b16 %v985, %v984
        %v989 = vsel %vm955, %v981, 0
        %991 = vmatpush.bf16.msra.mxu0 0
        %992 = vmatpush.bf16.msra.mxu0 0
        %993 = vmatpush.bf16.msra.mxu0 0
        %994 = vmatpush.bf16.msra.mxu0 0
        %995 = vmatpush.bf16.msra.mxu0 0
        %996 = vmatpush.bf16.msra.mxu0 0
        %997 = vmatpush.bf16.msra.mxu0 0
        %998 = vmatpush.bf16.msra.mxu0 %v986
        %999 = vmatmul.bf16.gmra.mxu0 %v989
        %v1000 = vpop.f32.mrf.mxu0
        %v1001 = vadd.f32 0.0, %v1000
        %v1002 = vpop.f32.mrf.mxu0
        %1003 = vdwg.mxu0
        %v1004 = vpack.c.bf16 %v1001, %v1001
        %1005 = vst [vmem:[#allocation3] sm:$0xf] %v1004
        %v1006 = vld [vmem:[#allocation2 + $0x4] sm:$0xf]
        %v1007 = vld [vmem:[#allocation2 + $0x24] sm:$0xf]
        %v1008 = vld [vmem:[#allocation2 + $0x14] sm:$0xf]
        %v1009 = vld [vmem:[#allocation2 + $0x34] sm:$0xf]
        %v1011 = vrot.slane %v928, 4
        %v1015 = vunpack.c.l.b16 %v1006
        %v1016 = vunpack.c.l.b16 %v1007
        %v1017 = vpack.c.b16 %v1016, %v1015
        %1019 = vmatpush.bf16.xpose.msra.mxu0 0
        %1020 = vmatpush.bf16.xpose.msra.mxu0 0
        %1021 = vmatpush.bf16.xpose.msra.mxu0 0
        %1022 = vmatpush.bf16.xpose.msra.mxu0 0
        %1023 = vmatpush.bf16.xpose.msra.mxu0 0
        %1024 = vmatpush.bf16.xpose.msra.mxu0 0
        %1025 = vmatpush.bf16.xpose.msra.mxu0 0
        %1026 = vmatpush.bf16.xpose.msra.mxu0 %v1017
        %1027 = vmatmul.bf16.gmra.mxu0 %v1011
        %v1028 = vpop.f32.mrf.mxu0
        %v1029 = vadd.f32 0.0, %v1028
        %v1030 = vpop.f32.mrf.mxu0
        %1031 = vdwg.mxu0
        %v1032 = vsel %vm955, %v1029, -inf
        %1033 = vmax.xlane.f32.xlu0 %v1032
        %v1034 = vpop.xlane.xlu0 %1033
        %v1035 = vsub.f32 %v1029, %v1034
        %v1036 = vmul.f32 %v1035, 1.442695
        %v1037 = vpow.pop %v1036
        %v1038 = vsel %vm955, %v1037, 0.0
        %1039 = vadd.xlane.f32.xlu0 %v1038
        %v1040 = vpop.xlane.xlu0 %1039
        %v1041 = vrcp.pop %v1040
        %v1042 = vmul.f32 %v1040, %v1041
        %v1043 = vsub.f32 1.0, %v1042
        %v1044 = vmul.f32 %v1041, %v1043
        %v1045 = vadd.f32 %v1041, %v1044
        %vm1046 = vweird.f32 %v1040
        %vm1047 = vweird.f32 %v1041
        %vm1048 = vmor %vm1046, %vm1047
        %v1049 = vsel %vm1048, %v1041, %v1045
        %v1050 = vand.u32 2147483647, %v1040
        %vm1051 = vcmp.eq.f32.partialorder %v1050, 8.507059e+37
        %v1052 = vand.u32 %v1040, 2147483648
        %v1053 = vor.u32 1.1754944e-38, %v1052
        %v1054 = vsel %vm1051, %v1053, %v1049
        %v1055 = vmul.f32 %v1037, %v1054
        %s1056 = scalar_lea.vmem %s535, 8 [#allocation6]
        %1057 = vst.msk [vmem:[%s1056] sm:$0xff] %vm955, %v1055
        %v1058 = vpack.c.bf16 %v1055, %v1055
        %v1061 = vunpack.c.l.b16 %v1008
        %v1062 = vunpack.c.l.b16 %v1009
        %v1063 = vpack.c.b16 %v1062, %v1061
        %v1066 = vsel %vm955, %v1058, 0
        %1068 = vmatpush.bf16.msra.mxu0 0
        %1069 = vmatpush.bf16.msra.mxu0 0
        %1070 = vmatpush.bf16.msra.mxu0 0
        %1071 = vmatpush.bf16.msra.mxu0 0
        %1072 = vmatpush.bf16.msra.mxu0 0
        %1073 = vmatpush.bf16.msra.mxu0 0
        %1074 = vmatpush.bf16.msra.mxu0 0
        %1075 = vmatpush.bf16.msra.mxu0 %v1063
        %1076 = vmatmul.bf16.gmra.mxu0 %v1066
        %v1077 = vpop.f32.mrf.mxu0
        %v1078 = vadd.f32 0.0, %v1077
        %v1079 = vpop.f32.mrf.mxu0
        %1080 = vdwg.mxu0
        %v1081 = vpack.c.bf16 %v1078, %v1078
        %1082 = vst [vmem:[#allocation3 + $0x4] sm:$0xf] %v1081
        %v1083 = vld [vmem:[#allocation2 + $0x8] sm:$0xf]
        %v1084 = vld [vmem:[#allocation2 + $0x28] sm:$0xf]
        %v1085 = vld [vmem:[#allocation2 + $0x18] sm:$0xf]
        %v1086 = vld [vmem:[#allocation2 + $0x38] sm:$0xf]
        %v1089 = vunpack.c.l.b16 %v1083
        %v1090 = vunpack.c.l.b16 %v1084
        %v1091 = vpack.c.b16 %v1090, %v1089
        %1093 = vmatpush.bf16.xpose.msra.mxu0 0
        %1094 = vmatpush.bf16.xpose.msra.mxu0 0
        %1095 = vmatpush.bf16.xpose.msra.mxu0 0
        %1096 = vmatpush.bf16.xpose.msra.mxu0 0
        %1097 = vmatpush.bf16.xpose.msra.mxu0 0
        %1098 = vmatpush.bf16.xpose.msra.mxu0 0
        %1099 = vmatpush.bf16.xpose.msra.mxu0 0
        %1100 = vmatpush.bf16.xpose.msra.mxu0 %v1091
        %1101 = vmatmul.bf16.gmra.mxu0 %v929
        %v1102 = vpop.f32.mrf.mxu0
        %v1103 = vadd.f32 0.0, %v1102
        %v1104 = vpop.f32.mrf.mxu0
        %1105 = vdwg.mxu0
        %v1106 = vsel %vm955, %v1103, -inf
        %1107 = vmax.xlane.f32.xlu0 %v1106
        %v1108 = vpop.xlane.xlu0 %1107
        %v1109 = vsub.f32 %v1103, %v1108
        %v1110 = vmul.f32 %v1109, 1.442695
        %v1111 = vpow.pop %v1110
        %v1112 = vsel %vm955, %v1111, 0.0
        %1113 = vadd.xlane.f32.xlu0 %v1112
        %v1114 = vpop.xlane.xlu0 %1113
        %v1115 = vrcp.pop %v1114
        %v1116 = vmul.f32 %v1114, %v1115
        %v1117 = vsub.f32 1.0, %v1116
        %v1118 = vmul.f32 %v1115, %v1117
        %v1119 = vadd.f32 %v1115, %v1118
        %vm1120 = vweird.f32 %v1114
        %vm1121 = vweird.f32 %v1115
        %vm1122 = vmor %vm1120, %vm1121
        %v1123 = vsel %vm1122, %v1115, %v1119
        %v1124 = vand.u32 2147483647, %v1114
        %vm1125 = vcmp.eq.f32.partialorder %v1124, 8.507059e+37
        %v1126 = vand.u32 %v1114, 2147483648
        %v1127 = vor.u32 1.1754944e-38, %v1126
        %v1128 = vsel %vm1125, %v1127, %v1123
        %v1129 = vmul.f32 %v1111, %v1128
        %s1130 = scalar_lea.vmem %s535, 16 [#allocation6]
        %1131 = vst.msk [vmem:[%s1130] sm:$0xff] %vm955, %v1129
        %v1132 = vpack.c.bf16 %v1129, %v1129
        %v1135 = vunpack.c.l.b16 %v1085
        %v1136 = vunpack.c.l.b16 %v1086
        %v1137 = vpack.c.b16 %v1136, %v1135
        %v1140 = vsel %vm955, %v1132, 0
        %1142 = vmatpush.bf16.msra.mxu0 0
        %1143 = vmatpush.bf16.msra.mxu0 0
        %1144 = vmatpush.bf16.msra.mxu0 0
        %1145 = vmatpush.bf16.msra.mxu0 0
        %1146 = vmatpush.bf16.msra.mxu0 0
        %1147 = vmatpush.bf16.msra.mxu0 0
        %1148 = vmatpush.bf16.msra.mxu0 0
        %1149 = vmatpush.bf16.msra.mxu0 %v1137
        %1150 = vmatmul.bf16.gmra.mxu0 %v1140
        %v1151 = vpop.f32.mrf.mxu0
        %v1152 = vadd.f32 0.0, %v1151
        %v1153 = vpop.f32.mrf.mxu0
        %1154 = vdwg.mxu0
        %v1155 = vpack.c.bf16 %v1152, %v1152
        %1156 = vst [vmem:[#allocation3 + $0x8] sm:$0xf] %v1155
        %v1157 = vld [vmem:[#allocation2 + $0xc] sm:$0xf]
        %v1158 = vld [vmem:[#allocation2 + $0x2c] sm:$0xf]
        %v1159 = vld [vmem:[#allocation2 + $0x1c] sm:$0xf]
        %v1160 = vld [vmem:[#allocation2 + $0x3c] sm:$0xf]
        %v1162 = vrot.slane %v929, 4
        %v1166 = vunpack.c.l.b16 %v1157
        %v1167 = vunpack.c.l.b16 %v1158
        %v1168 = vpack.c.b16 %v1167, %v1166
        %1170 = vmatpush.bf16.xpose.msra.mxu0 0
        %1171 = vmatpush.bf16.xpose.msra.mxu0 0
        %1172 = vmatpush.bf16.xpose.msra.mxu0 0
        %1173 = vmatpush.bf16.xpose.msra.mxu0 0
        %1174 = vmatpush.bf16.xpose.msra.mxu0 0
        %1175 = vmatpush.bf16.xpose.msra.mxu0 0
        %1176 = vmatpush.bf16.xpose.msra.mxu0 0
        %1177 = vmatpush.bf16.xpose.msra.mxu0 %v1168
        %1178 = vmatmul.bf16.gmra.mxu0 %v1162
        %v1179 = vpop.f32.mrf.mxu0
        %v1180 = vadd.f32 0.0, %v1179
        %v1181 = vpop.f32.mrf.mxu0
        %1182 = vdwg.mxu0
        %v1183 = vsel %vm955, %v1180, -inf
        %1184 = vmax.xlane.f32.xlu0 %v1183
        %v1185 = vpop.xlane.xlu0 %1184
        %v1186 = vsub.f32 %v1180, %v1185
        %v1187 = vmul.f32 %v1186, 1.442695
        %v1188 = vpow.pop %v1187
        %v1189 = vsel %vm955, %v1188, 0.0
        %1190 = vadd.xlane.f32.xlu0 %v1189
        %v1191 = vpop.xlane.xlu0 %1190
        %v1192 = vrcp.pop %v1191
        %v1193 = vmul.f32 %v1191, %v1192
        %v1194 = vsub.f32 1.0, %v1193
        %v1195 = vmul.f32 %v1192, %v1194
        %v1196 = vadd.f32 %v1192, %v1195
        %vm1197 = vweird.f32 %v1191
        %vm1198 = vweird.f32 %v1192
        %vm1199 = vmor %vm1197, %vm1198
        %v1200 = vsel %vm1199, %v1192, %v1196
        %v1201 = vand.u32 2147483647, %v1191
        %vm1202 = vcmp.eq.f32.partialorder %v1201, 8.507059e+37
        %v1203 = vand.u32 %v1191, 2147483648
        %v1204 = vor.u32 1.1754944e-38, %v1203
        %v1205 = vsel %vm1202, %v1204, %v1200
        %v1206 = vmul.f32 %v1188, %v1205
        %s1207 = scalar_lea.vmem %s535, 24 [#allocation6]
        %1208 = vst.msk [vmem:[%s1207] sm:$0xff] %vm955, %v1206
        %v1209 = vpack.c.bf16 %v1206, %v1206
        %v1212 = vunpack.c.l.b16 %v1159
        %v1213 = vunpack.c.l.b16 %v1160
        %v1214 = vpack.c.b16 %v1213, %v1212
        %v1217 = vsel %vm955, %v1209, 0
        %1219 = vmatpush.bf16.msra.mxu0 0
        %1220 = vmatpush.bf16.msra.mxu0 0
        %1221 = vmatpush.bf16.msra.mxu0 0
        %1222 = vmatpush.bf16.msra.mxu0 0
        %1223 = vmatpush.bf16.msra.mxu0 0
        %1224 = vmatpush.bf16.msra.mxu0 0
        %1225 = vmatpush.bf16.msra.mxu0 0
        %1226 = vmatpush.bf16.msra.mxu0 %v1214
        %1227 = vmatmul.bf16.gmra.mxu0 %v1217
        %v1228 = vpop.f32.mrf.mxu0
        %v1229 = vadd.f32 0.0, %v1228
        %v1230 = vpop.f32.mrf.mxu0
        %1231 = vdwg.mxu0
        %v1232 = vpack.c.bf16 %v1229, %v1229
        %1233 = vst [vmem:[#allocation3 + $0xc] sm:$0xf] %v1232
        %v1234 = vld [vmem:[#allocation3] sm:$0xff]
        %v1235 = vld [vmem:[#allocation3 + $0x8] sm:$0xff]
        %v1236 = vld [vmem:[%s6] sm:$0xf]
        %v1237 = vld [vmem:[%s6 + $0x4] sm:$0xf]
        %v1238 = vld [vmem:[%s6 + $0x8] sm:$0xf]
        %v1239 = vld [vmem:[%s6 + $0xc] sm:$0xf]
        %v1240 = vld [vmem:[%s6 + $0x10] sm:$0xf]
        %v1241 = vld [vmem:[%s6 + $0x14] sm:$0xf]
        %v1242 = vld [vmem:[%s6 + $0x18] sm:$0xf]
        %v1243 = vld [vmem:[%s6 + $0x1c] sm:$0xf]
        %v1244 = vld [vmem:[%s6 + $0x20] sm:$0xf]
        %v1245 = vld [vmem:[%s6 + $0x24] sm:$0xf]
        %v1246 = vld [vmem:[%s6 + $0x28] sm:$0xf]
        %v1247 = vld [vmem:[%s6 + $0x2c] sm:$0xf]
        %v1248 = vld [vmem:[%s6 + $0x30] sm:$0xf]
        %v1249 = vld [vmem:[%s6 + $0x34] sm:$0xf]
        %v1250 = vld [vmem:[%s6 + $0x38] sm:$0xf]
        %v1251 = vld [vmem:[%s6 + $0x3c] sm:$0xf]
        %v1252 = vld [vmem:[%s6 + $0x40] sm:$0xf]
        %v1253 = vld [vmem:[%s6 + $0x44] sm:$0xf]
        %v1254 = vld [vmem:[%s6 + $0x48] sm:$0xf]
        %v1255 = vld [vmem:[%s6 + $0x4c] sm:$0xf]
        %v1256 = vld [vmem:[%s6 + $0x50] sm:$0xf]
        %v1257 = vld [vmem:[%s6 + $0x54] sm:$0xf]
        %v1258 = vld [vmem:[%s6 + $0x58] sm:$0xf]
        %v1259 = vld [vmem:[%s6 + $0x5c] sm:$0xf]
        %v1260 = vld [vmem:[%s6 + $0x60] sm:$0xf]
        %v1261 = vld [vmem:[%s6 + $0x64] sm:$0xf]
        %v1262 = vld [vmem:[%s6 + $0x68] sm:$0xf]
        %v1263 = vld [vmem:[%s6 + $0x6c] sm:$0xf]
        %v1264 = vld [vmem:[%s6 + $0x70] sm:$0xf]
        %v1265 = vld [vmem:[%s6 + $0x74] sm:$0xf]
        %v1266 = vld [vmem:[%s6 + $0x78] sm:$0xf]
        %v1267 = vld [vmem:[%s6 + $0x7c] sm:$0xf]
        %v1268 = vld [vmem:[%s6 + $0x80] sm:$0xf]
        %v1269 = vld [vmem:[%s6 + $0x84] sm:$0xf]
        %v1270 = vld [vmem:[%s6 + $0x88] sm:$0xf]
        %v1271 = vld [vmem:[%s6 + $0x8c] sm:$0xf]
        %v1272 = vld [vmem:[%s6 + $0x90] sm:$0xf]
        %v1273 = vld [vmem:[%s6 + $0x94] sm:$0xf]
        %v1274 = vld [vmem:[%s6 + $0x98] sm:$0xf]
        %v1275 = vld [vmem:[%s6 + $0x9c] sm:$0xf]
        %v1276 = vld [vmem:[%s6 + $0xa0] sm:$0xf]
        %v1277 = vld [vmem:[%s6 + $0xa4] sm:$0xf]
        %v1278 = vld [vmem:[%s6 + $0xa8] sm:$0xf]
        %v1279 = vld [vmem:[%s6 + $0xac] sm:$0xf]
        %v1280 = vld [vmem:[%s6 + $0xb0] sm:$0xf]
        %v1281 = vld [vmem:[%s6 + $0xb4] sm:$0xf]
        %v1282 = vld [vmem:[%s6 + $0xb8] sm:$0xf]
        %v1283 = vld [vmem:[%s6 + $0xbc] sm:$0xf]
        %v1284 = vld [vmem:[%s6 + $0xc0] sm:$0xf]
        %v1285 = vld [vmem:[%s6 + $0xc4] sm:$0xf]
        %v1286 = vld [vmem:[%s6 + $0xc8] sm:$0xf]
        %v1287 = vld [vmem:[%s6 + $0xcc] sm:$0xf]
        %v1288 = vld [vmem:[%s6 + $0xd0] sm:$0xf]
        %v1289 = vld [vmem:[%s6 + $0xd4] sm:$0xf]
        %v1290 = vld [vmem:[%s6 + $0xd8] sm:$0xf]
        %v1291 = vld [vmem:[%s6 + $0xdc] sm:$0xf]
        %v1292 = vld [vmem:[%s6 + $0xe0] sm:$0xf]
        %v1293 = vld [vmem:[%s6 + $0xe4] sm:$0xf]
        %v1294 = vld [vmem:[%s6 + $0xe8] sm:$0xf]
        %v1295 = vld [vmem:[%s6 + $0xec] sm:$0xf]
        %v1296 = vld [vmem:[%s6 + $0xf0] sm:$0xf]
        %v1297 = vld [vmem:[%s6 + $0xf4] sm:$0xf]
        %v1298 = vld [vmem:[%s6 + $0xf8] sm:$0xf]
        %v1299 = vld [vmem:[%s6 + $0xfc] sm:$0xf]
        %v1300 = vld [vmem:[%s7] sm:$0x1]
        %v1302 = vperm.slane %v1300, 0
        %v1306 = vunpack.c.l.b16 %v1234
        %v1307 = vunpack.c.h.b16 %v1234
        %v1308 = vunpack.c.l.b16 %v1235
        %v1309 = vunpack.c.h.b16 %v1235
        %v1310 = vpack.c.b16 %v1306, %v1306
        %v1311 = vpack.c.b16 %v1307, %v1307
        %v1312 = vpack.c.b16 %v1308, %v1308
        %v1313 = vpack.c.b16 %v1309, %v1309
        %v1382 = vunpack.c.l.b16 %v1236
        %v1383 = vunpack.c.l.b16 %v1237
        %v1384 = vunpack.c.l.b16 %v1238
        %v1385 = vunpack.c.l.b16 %v1239
        %v1386 = vunpack.c.l.b16 %v1240
        %v1387 = vunpack.c.l.b16 %v1241
        %v1388 = vunpack.c.l.b16 %v1242
        %v1389 = vunpack.c.l.b16 %v1243
        %v1390 = vunpack.c.l.b16 %v1244
        %v1391 = vunpack.c.l.b16 %v1245
        %v1392 = vunpack.c.l.b16 %v1246
        %v1393 = vunpack.c.l.b16 %v1247
        %v1394 = vunpack.c.l.b16 %v1248
        %v1395 = vunpack.c.l.b16 %v1249
        %v1396 = vunpack.c.l.b16 %v1250
        %v1397 = vunpack.c.l.b16 %v1251
        %v1398 = vunpack.c.l.b16 %v1252
        %v1399 = vunpack.c.l.b16 %v1253
        %v1400 = vunpack.c.l.b16 %v1254
        %v1401 = vunpack.c.l.b16 %v1255
        %v1402 = vunpack.c.l.b16 %v1256
        %v1403 = vunpack.c.l.b16 %v1257
        %v1404 = vunpack.c.l.b16 %v1258
        %v1405 = vunpack.c.l.b16 %v1259
        %v1406 = vunpack.c.l.b16 %v1260
        %v1407 = vunpack.c.l.b16 %v1261
        %v1408 = vunpack.c.l.b16 %v1262
        %v1409 = vunpack.c.l.b16 %v1263
        %v1410 = vunpack.c.l.b16 %v1264
        %v1411 = vunpack.c.l.b16 %v1265
        %v1412 = vunpack.c.l.b16 %v1266
        %v1413 = vunpack.c.l.b16 %v1267
        %v1414 = vunpack.c.l.b16 %v1268
        %v1415 = vunpack.c.l.b16 %v1269
        %v1416 = vunpack.c.l.b16 %v1270
        %v1417 = vunpack.c.l.b16 %v1271
        %v1418 = vunpack.c.l.b16 %v1272
        %v1419 = vunpack.c.l.b16 %v1273
        %v1420 = vunpack.c.l.b16 %v1274
        %v1421 = vunpack.c.l.b16 %v1275
        %v1422 = vunpack.c.l.b16 %v1276
        %v1423 = vunpack.c.l.b16 %v1277
        %v1424 = vunpack.c.l.b16 %v1278
        %v1425 = vunpack.c.l.b16 %v1279
        %v1426 = vunpack.c.l.b16 %v1280
        %v1427 = vunpack.c.l.b16 %v1281
        %v1428 = vunpack.c.l.b16 %v1282
        %v1429 = vunpack.c.l.b16 %v1283
        %v1430 = vunpack.c.l.b16 %v1284
        %v1431 = vunpack.c.l.b16 %v1285
        %v1432 = vunpack.c.l.b16 %v1286
        %v1433 = vunpack.c.l.b16 %v1287
        %v1434 = vunpack.c.l.b16 %v1288
        %v1435 = vunpack.c.l.b16 %v1289
        %v1436 = vunpack.c.l.b16 %v1290
        %v1437 = vunpack.c.l.b16 %v1291
        %v1438 = vunpack.c.l.b16 %v1292
        %v1439 = vunpack.c.l.b16 %v1293
        %v1440 = vunpack.c.l.b16 %v1294
        %v1441 = vunpack.c.l.b16 %v1295
        %v1442 = vunpack.c.l.b16 %v1296
        %v1443 = vunpack.c.l.b16 %v1297
        %v1444 = vunpack.c.l.b16 %v1298
        %v1445 = vunpack.c.l.b16 %v1299
        %v1446 = vpack.c.b16 %v1383, %v1382
        %v1447 = vpack.c.b16 %v1385, %v1384
        %v1448 = vpack.c.b16 %v1387, %v1386
        %v1449 = vpack.c.b16 %v1389, %v1388
        %v1450 = vpack.c.b16 %v1391, %v1390
        %v1451 = vpack.c.b16 %v1393, %v1392
        %v1452 = vpack.c.b16 %v1395, %v1394
        %v1453 = vpack.c.b16 %v1397, %v1396
        %v1454 = vpack.c.b16 %v1399, %v1398
        %v1455 = vpack.c.b16 %v1401, %v1400
        %v1456 = vpack.c.b16 %v1403, %v1402
        %v1457 = vpack.c.b16 %v1405, %v1404
        %v1458 = vpack.c.b16 %v1407, %v1406
        %v1459 = vpack.c.b16 %v1409, %v1408
        %v1460 = vpack.c.b16 %v1411, %v1410
        %v1461 = vpack.c.b16 %v1413, %v1412
        %v1462 = vpack.c.b16 %v1415, %v1414
        %v1463 = vpack.c.b16 %v1417, %v1416
        %v1464 = vpack.c.b16 %v1419, %v1418
        %v1465 = vpack.c.b16 %v1421, %v1420
        %v1466 = vpack.c.b16 %v1423, %v1422
        %v1467 = vpack.c.b16 %v1425, %v1424
        %v1468 = vpack.c.b16 %v1427, %v1426
        %v1469 = vpack.c.b16 %v1429, %v1428
        %v1470 = vpack.c.b16 %v1431, %v1430
        %v1471 = vpack.c.b16 %v1433, %v1432
        %v1472 = vpack.c.b16 %v1435, %v1434
        %v1473 = vpack.c.b16 %v1437, %v1436
        %v1474 = vpack.c.b16 %v1439, %v1438
        %v1475 = vpack.c.b16 %v1441, %v1440
        %v1476 = vpack.c.b16 %v1443, %v1442
        %v1477 = vpack.c.b16 %v1445, %v1444
        %1510 = vmatpush.bf16.msra.mxu0 %v1453
        %1511 = vmatpush.bf16.msra.mxu0 %v1452
        %1512 = vmatpush.bf16.msra.mxu0 %v1451
        %1513 = vmatpush.bf16.msra.mxu0 %v1450
        %1514 = vmatpush.bf16.msra.mxu0 %v1449
        %1515 = vmatpush.bf16.msra.mxu0 %v1448
        %1516 = vmatpush.bf16.msra.mxu0 %v1447
        %1517 = vmatpush.bf16.msra.mxu0 %v1446
        %1518 = vmatmul.bf16.gmra.mxu0 %v1310
        %v1519 = vpop.f32.mrf.mxu0
        %v1520 = vadd.f32 %v1302, %v1519
        %v1521 = vpop.f32.mrf.mxu0
        %1522 = vdwg.mxu0
        %1523 = vmatpush.bf16.msra.mxu0 %v1461
        %1524 = vmatpush.bf16.msra.mxu0 %v1460
        %1525 = vmatpush.bf16.msra.mxu0 %v1459
        %1526 = vmatpush.bf16.msra.mxu0 %v1458
        %1527 = vmatpush.bf16.msra.mxu0 %v1457
        %1528 = vmatpush.bf16.msra.mxu0 %v1456
        %1529 = vmatpush.bf16.msra.mxu0 %v1455
        %1530 = vmatpush.bf16.msra.mxu0 %v1454
        %1531 = vmatmul.bf16.gmra.mxu0 %v1311
        %v1532 = vpop.f32.mrf.mxu0
        %v1533 = vadd.f32 %v1520, %v1532
        %v1534 = vpop.f32.mrf.mxu0
        %1535 = vdwg.mxu0
        %1536 = vmatpush.bf16.msra.mxu0 %v1469
        %1537 = vmatpush.bf16.msra.mxu0 %v1468
        %1538 = vmatpush.bf16.msra.mxu0 %v1467
        %1539 = vmatpush.bf16.msra.mxu0 %v1466
        %1540 = vmatpush.bf16.msra.mxu0 %v1465
        %1541 = vmatpush.bf16.msra.mxu0 %v1464
        %1542 = vmatpush.bf16.msra.mxu0 %v1463
        %1543 = vmatpush.bf16.msra.mxu0 %v1462
        %1544 = vmatmul.bf16.gmra.mxu0 %v1312
        %v1545 = vpop.f32.mrf.mxu0
        %v1546 = vadd.f32 %v1533, %v1545
        %v1547 = vpop.f32.mrf.mxu0
        %1548 = vdwg.mxu0
        %1549 = vmatpush.bf16.msra.mxu0 %v1477
        %1550 = vmatpush.bf16.msra.mxu0 %v1476
        %1551 = vmatpush.bf16.msra.mxu0 %v1475
        %1552 = vmatpush.bf16.msra.mxu0 %v1474
        %1553 = vmatpush.bf16.msra.mxu0 %v1473
        %1554 = vmatpush.bf16.msra.mxu0 %v1472
        %1555 = vmatpush.bf16.msra.mxu0 %v1471
        %1556 = vmatpush.bf16.msra.mxu0 %v1470
        %1557 = vmatmul.bf16.gmra.mxu0 %v1313
        %v1558 = vpop.f32.mrf.mxu0
        %v1559 = vadd.f32 %v1546, %v1558
        %v1560 = vpop.f32.mrf.mxu0
        %1561 = vdwg.mxu0
        %v1562 = vadd.f32 %v808, %v1559
        %v1563 = vsel %vm868, %v1562, 0.0
        %1564 = vadd.xlane.f32.xlu0 %v1563
        %v1565 = vpop.xlane.xlu0 %1564
        %v1566 = vrcp.pop 32.0
        %v1567 = vmul.f32 32.0, %v1566
        %v1568 = vsub.f32 1.0, %v1567
        %v1569 = vmul.f32 %v1566, %v1568
        %v1570 = vadd.f32 %v1566, %v1569
        %vm1571 = vweird.f32 %v1566
        %v1572 = vsel %vm1571, %v1566, %v1570
        %v1573 = vmul.f32 %v1565, %v1572
        %v1574 = vsub.f32 %v1562, %v1573
        %v1575 = vmul.f32 %v1574, %v1574
        %v1576 = vsel %vm868, %v1575, 0.0
        %1577 = vadd.xlane.f32.xlu0 %v1576
        %v1578 = vpop.xlane.xlu0 %1577
        %v1579 = vmul.f32 %v1578, %v1572
        %v1580 = vadd.f32 %v1579, 1e-05
        %v1581 = vrsqrt.pop %v1580
        %v1582 = vmul.f32 %v1581, %v1580
        %v1583 = vmul.f32 %v1582, %v1581
        %v1584 = vmul.f32 0.5, %v1583
        %v1585 = vsub.f32 1.5, %v1584
        %v1586 = vmul.f32 %v1581, %v1585
        %vm1587 = vweird.f32 %v1580
        %vm1588 = vweird.f32 %v1581
        %vm1589 = vmor %vm1587, %vm1588
        %v1590 = vsel %vm1589, %v1581, %v1586
        %v1591 = vmul.f32 %v1574, %v1590
        %v1593 = vperm.slane %v930, 0
        %v1595 = vmul.f32 %v1591, %v1593
        %v1597 = vperm.slane %v931, 0
        %v1599 = vadd.f32 %v1595, %v1597
        %v1600 = vpack.c.bf16 %v1599, %v1599
        %v1601 = vld [vmem:[%s8] sm:$0xf]
        %v1602 = vld [vmem:[%s8 + $0x4] sm:$0xf]
        %v1603 = vld [vmem:[%s8 + $0x8] sm:$0xf]
        %v1604 = vld [vmem:[%s8 + $0xc] sm:$0xf]
        %v1605 = vld [vmem:[%s9] sm:$0x1]
        %v1607 = vperm.slane %v1605, 0
        %v1613 = vunpack.c.l.b16 %v1601
        %v1614 = vunpack.c.l.b16 %v1602
        %v1615 = vunpack.c.l.b16 %v1603
        %v1616 = vunpack.c.l.b16 %v1604
        %v1617 = vpack.c.b16 %v1614, %v1613
        %v1618 = vpack.c.b16 %v1616, %v1615
        %v1622 = vsel %vm868, %v1600, 0
        %1624 = vmatpush.bf16.msra.mxu0 0
        %1625 = vmatpush.bf16.msra.mxu0 0
        %1626 = vmatpush.bf16.msra.mxu0 0
        %1627 = vmatpush.bf16.msra.mxu0 0
        %1628 = vmatpush.bf16.msra.mxu0 0
        %1629 = vmatpush.bf16.msra.mxu0 0
        %1630 = vmatpush.bf16.msra.mxu0 %v1618
        %1631 = vmatpush.bf16.msra.mxu0 %v1617
        %1632 = vmatmul.bf16.gmra.mxu0 %v1622
        %v1633 = vpop.f32.mrf.mxu0
        %v1634 = vadd.f32 %v1607, %v1633
        %v1635 = vpop.f32.mrf.mxu0
        %1636 = vdwg.mxu0
        %v1637 = vmax.f32 %v1634, 0.0
        %v1638 = vpack.c.bf16 %v1637, %v1637
        %v1639 = vld [vmem:[%s10] sm:$0xf]
        %v1640 = vld [vmem:[%s10 + $0x4] sm:$0xf]
        %v1641 = vld [vmem:[%s10 + $0x8] sm:$0xf]
        %v1642 = vld [vmem:[%s10 + $0xc] sm:$0xf]
        %v1643 = vld [vmem:[%s10 + $0x10] sm:$0xf]
        %v1644 = vld [vmem:[%s10 + $0x14] sm:$0xf]
        %v1645 = vld [vmem:[%s10 + $0x18] sm:$0xf]
        %v1646 = vld [vmem:[%s10 + $0x1c] sm:$0xf]
        %v1647 = vld [vmem:[%s11] sm:$0x1]
        %v1649 = vperm.slane %v1647, 0
        %v1659 = vunpack.c.l.b16 %v1639
        %v1660 = vunpack.c.l.b16 %v1640
        %v1661 = vunpack.c.l.b16 %v1641
        %v1662 = vunpack.c.l.b16 %v1642
        %v1663 = vunpack.c.l.b16 %v1643
        %v1664 = vunpack.c.l.b16 %v1644
        %v1665 = vunpack.c.l.b16 %v1645
        %v1666 = vunpack.c.l.b16 %v1646
        %v1667 = vpack.c.b16 %v1660, %v1659
        %v1668 = vpack.c.b16 %v1662, %v1661
        %v1669 = vpack.c.b16 %v1664, %v1663
        %v1670 = vpack.c.b16 %v1666, %v1665
        %vm1675 = vcmask 523264
        %v1677 = vsel %vm1675, %v1638, 0
        %1679 = vmatpush.bf16.msra.mxu0 0
        %1680 = vmatpush.bf16.msra.mxu0 0
        %1681 = vmatpush.bf16.msra.mxu0 0
        %1682 = vmatpush.bf16.msra.mxu0 0
        %1683 = vmatpush.bf16.msra.mxu0 %v1670
        %1684 = vmatpush.bf16.msra.mxu0 %v1669
        %1685 = vmatpush.bf16.msra.mxu0 %v1668
        %1686 = vmatpush.bf16.msra.mxu0 %v1667
        %1687 = vmatmul.bf16.gmra.mxu0 %v1677
        %v1688 = vpop.f32.mrf.mxu0
        %v1689 = vadd.f32 %v1649, %v1688
        %v1690 = vpop.f32.mrf.mxu0
        %1691 = vdwg.mxu0
        %v1692 = vadd.f32 %v1599, %v1689
        %v1693 = vsel %vm868, %v1692, 0.0
        %1694 = vadd.xlane.f32.xlu0 %v1693
        %v1695 = vpop.xlane.xlu0 %1694
        %v1696 = vmul.f32 %v1695, %v1572
        %v1697 = vsub.f32 %v1692, %v1696
        %v1698 = vmul.f32 %v1697, %v1697
        %v1699 = vsel %vm868, %v1698, 0.0
        %1700 = vadd.xlane.f32.xlu0 %v1699
        %v1701 = vpop.xlane.xlu0 %1700
        %v1702 = vmul.f32 %v1701, %v1572
        %v1703 = vadd.f32 %v1702, 1e-05
        %v1704 = vrsqrt.pop %v1703
        %v1705 = vmul.f32 %v1704, %v1703
        %v1706 = vmul.f32 %v1705, %v1704
        %v1707 = vmul.f32 0.5, %v1706
        %v1708 = vsub.f32 1.5, %v1707
        %v1709 = vmul.f32 %v1704, %v1708
        %vm1710 = vweird.f32 %v1703
        %vm1711 = vweird.f32 %v1704
        %vm1712 = vmor %vm1710, %vm1711
        %v1713 = vsel %vm1712, %v1704, %v1709
        %v1714 = vmul.f32 %v1697, %v1713
        %v1715 = vmul.f32 %v1714, %v1593
        %v1716 = vadd.f32 %v1715, %v1597
        %1717 = vst.msk [vmem:[%s528] sm:$0xff] %vm868, %v1716
        %s1718 = sand.u32 %s361, 1
        %s1719 = scalar_lea.sflag [#allocation5], %s1718
        %s1720 = sand.u32 %s361, 1
        %s1721 = smul.addr %s1720, 8
        %s1722 = scalar_lea.vmem [#allocation4], %s1721
        %s1723 = sand.u32 %s389, 1
        %s1724 = scalar_lea.sflag [#allocation7], %s1723
        %s1725 = sand.u32 %s389, 1
        %s1726 = smul.addr %s1725, 32
        %s1727 = scalar_lea.vmem [#allocation6], %s1726
        // Predicated region
        $region81: #{tpu_custom_call.1} parent=75 // pred_check
          %p1728 = pneg %p371
        $region82: #{tpu_custom_call.1} parent=75 // pred_check_branch
          %1730 = sbr.rel (%p1728) target = $region84
        $region83: #{tpu_custom_call.1} parent=75 // pred_region
          %1732 = vsyncadd %s1719, 0
          %s1733 = sadd.s32 %s38, %s37
          %s1734 = smul.addr %s1733, 8
          %s1735 = scalar_lea.hbm %s14, %s1734
          %s1737 = sshll.u32 %s1722, 4
          %s1738 = int_to_ptr.vmem [resolvable:$true] %s1737
          %s1739 = sshll.u32 %s1735, 4
          %s1740 = int_to_ptr.hbm [resolvable:$true] %s1739
          %1742 = dma.vmem_to_hbm [thread:$0]  %s1738, 128, %s1740, %s1719
        $region84: #{tpu_custom_call.1} parent=75 // pred_fallthru
          _
        // Predicated region
        $region85: #{tpu_custom_call.1} parent=75 // pred_check
          %p1743 = pneg %p399
        $region86: #{tpu_custom_call.1} parent=75 // pred_check_branch
          %1745 = sbr.rel (%p1743) target = $region88
        $region87: #{tpu_custom_call.1} parent=75 // pred_region
          %1747 = vsyncadd %s1724, 0
          %s1748 = smul.addr %s37, 4
          %s1749 = sadd.s32 %s38, %s1748
          %s1750 = smul.addr %s1749, 8
          %s1751 = scalar_lea.hbm %s15, %s1750
          %s1752 = sshll.u32 %s1727, 4
          %s1753 = int_to_ptr.vmem [resolvable:$true] %s1752
          %s1754 = sshll.u32 %s1751, 4
          %s1755 = int_to_ptr.hbm [resolvable:$true] %s1754
          %1760 = dma.vmem_to_hbm [thread:$0]  %s1753, 512, %s1755, %s1724, 128, 128, 8
        $region88: #{tpu_custom_call.1} parent=75 // pred_fallthru
          _
      $region76: #{tpu_custom_call.1} parent=5 // pred_fallthru
        _
      %p1761 = scmp.le.s32.totalorder 2, %s28
      // Predicated region
      $region89: #{tpu_custom_call.1} parent=5 // pred_check
        %p1762 = pneg %p1761
      $region90: #{tpu_custom_call.1} parent=5 // pred_check_branch
        %1764 = sbr.rel (%p1762) target = $region92
      $region91: #{tpu_custom_call.1} parent=5 // pred_region
        %s1765 = ssub.s32 %s28, 2
        // Predicated region
        $region93: #{tpu_custom_call.1} parent=91 // pred_check
          %p1766 = pneg %p377
        $region94: #{tpu_custom_call.1} parent=91 // pred_check_branch
          %1768 = sbr.rel (%p1766) target = $region96
        $region95: #{tpu_custom_call.1} parent=91 // pred_region
          %s1769 = sand.u32 %s362, 1
          %s1770 = scalar_lea.sflag [#allocation5], %s1769
          %s1771 = sand.u32 %s362, 1
          %s1772 = smul.addr %s1771, 8
          %s1773 = scalar_lea.vmem [#allocation4], %s1772
          %1775 = dma.done %s1770, 128
        $region96: #{tpu_custom_call.1} parent=91 // pred_fallthru
          _
        // Predicated region
        $region97: #{tpu_custom_call.1} parent=91 // pred_check
          %p1776 = pneg %p405
        $region98: #{tpu_custom_call.1} parent=91 // pred_check_branch
          %1778 = sbr.rel (%p1776) target = $region100
        $region99: #{tpu_custom_call.1} parent=91 // pred_region
          %s1779 = sand.u32 %s390, 1
          %s1780 = scalar_lea.sflag [#allocation7], %s1779
          %s1781 = sand.u32 %s390, 1
          %s1782 = smul.addr %s1781, 32
          %s1783 = scalar_lea.vmem [#allocation6], %s1782
          %1785 = dma.done %s1780, 512
        $region100: #{tpu_custom_call.1} parent=91 // pred_fallthru
          _
      $region92: #{tpu_custom_call.1} parent=5 // pred_fallthru
        _
    $region6: #{tpu_custom_call.1} parent=1 // loop_footer
      %s32 = sadd.s32 1, %s28
    $region7: #{tpu_custom_call.1} parent=1 // loop_footer_branch
      %27 = sbr.rel target = $region3
    $region8: #{tpu_custom_call.1} parent=1 // loop_exit
      _
    %1786 = vsyncpa [#allocation5], 1
    %s1787 = scalar_lea.sflag [#allocation5], 1
    %1788 = vsyncpa %s1787, 1
    %1789 = vsyncpa [#allocation7], 1
    %s1790 = scalar_lea.sflag [#allocation7], 1
    %1791 = vsyncpa %s1790, 1

</llo_original>
